<compile_context>
chip_gen: v5e
topology: v5e:2x2
jax: 0.10.0
libtpu: 0.0.40
codegen_flags: <defaults>
</compile_context>

<pallas_src>
import jax
import jax.numpy as jnp
import numpy as np
from jax.experimental import pallas as pl
from jax.experimental.pallas import tpu as pltpu


def _block_kernel(xp_ref, w1_ref, w2_ref, scale_ref, bias_ref, out_ref):
    """Nb images per grid step: conv3x3 -> BN -> ReLU -> conv3x3 -> BN -> +id -> ReLU."""
    Nb, Hp, Wp, Cin = xp_ref.shape
    H, W = Hp - 2, Wp - 2
    Cout = out_ref.shape[-1]
    M = Nb * H * W
    cd = w1_ref.dtype                       # compute dtype for the matmul operands

    # load folded BN scale/bias once; reused by both epilogues (implicit sublane
    # broadcast inside the fused VPU ops — cheaper than materializing (M, Cout))
    scale = scale_ref[...]                  # (1, Cout) f32
    bias = bias_ref[...]                    # (1, Cout) f32

    xp = xp_ref[...]                        # (Nb, Hp, Wp, Cin) f32 padded input tile

    def conv3x3(x_pad, w_ref, cin):
        # 3 fused matmuls with K = 3*cin: the three dx-shifted patches are
        # concatenated along the channel (lane) dim per ky row.  Operands are
        # cast to the compute dtype (bf16 by default) just before the slices so
        # the patch build and MXU inputs are half-width; accumulation is f32.
        acc = None
        for dy in range(3):
            rows = x_pad[:, dy:dy + H, :, :].astype(cd)              # (Nb, H, Wp, cin)
            patch = jnp.concatenate(
                [rows[:, :, dx:dx + W, :] for dx in range(3)], axis=-1)  # (Nb, H, W, 3*cin)
            part = jnp.dot(patch.reshape(M, 3 * cin), w_ref[dy],
                           preferred_element_type=jnp.float32)           # (M, Cout) f32
            acc = part if acc is None else acc + part
        return acc

    # conv1 -> batch_norm2 -> ReLU  (the PyTorch forward uses batch_norm2 here too)
    y1 = jnp.maximum(conv3x3(xp, w1_ref, Cin) * scale + bias, 0.0)       # (M, Cout) f32

    # zero-pad the intermediate as a value; H pad is a cheap major-dim concat,
    # the W pad is the one unavoidable sublane relayout pass (done in compute
    # dtype so it is half-width under bf16).
    y1_hw = y1.reshape(Nb, H, W, Cout).astype(cd)
    zc = jnp.zeros((Nb, H, 1, Cout), cd)
    zr = jnp.zeros((Nb, 1, Wp, Cout), cd)
    y1p = jnp.concatenate(
        [zr, jnp.concatenate([zc, y1_hw, zc], axis=2), zr], axis=1)      # (Nb, Hp, Wp, Cout)

    # conv2 -> batch_norm2
    y2 = conv3x3(y1p, w2_ref, Cout) * scale + bias                       # (M, Cout) f32

    # residual: exact f32, sliced from the interior of the f32 padded input tile,
    # deferred to just before the add so it is not live across both convs.
    identity = xp[:, 1:1 + H, 1:1 + W, :].reshape(M, Cin)                # f32

    out = jnp.maximum(y2 + identity, 0.0)
    out_ref[...] = out.reshape(Nb, H, W, Cout).astype(out_ref.dtype)


def block_forward(x_nchw, w1, w2, gamma, beta, running_mean, running_var,
                  eps=1e-5, compute_dtype=jnp.bfloat16, out_dtype=jnp.float32,
                  images_per_step=None):
    """x_nchw: (N, Cin, H, W) f32. Conv weights in PyTorch layout (Cout, Cin, 3, 3).

    compute_dtype controls the MXU operand dtype only (bf16 default, f32 optional);
    accumulation, BN epilogues and the residual add are always f32.
    """
    N, Cin, H, W = x_nchw.shape
    Cout = w1.shape[0]
    assert Cin == Cout, "identity residual path requires matching channels"

    # NHWC, zero halo.  Kept f32 so the skip connection is exact (matmul operands
    # are cast to compute_dtype inside the kernel).
    x = jnp.transpose(x_nchw, (0, 2, 3, 1))
    x_pad = jnp.pad(x, ((0, 0), (1, 1), (1, 1), (0, 0))).astype(jnp.float32)

    # (Cout, Cin, ky, kx) -> (ky, kx*Cin, Cout): matches the dx-major patch concat
    w1_k = jnp.transpose(w1, (2, 3, 1, 0)).reshape(3, 3 * Cin, Cout).astype(compute_dtype)
    w2_k = jnp.transpose(w2, (2, 3, 1, 0)).reshape(3, 3 * Cout, Cout).astype(compute_dtype)

    # fold inference-mode BatchNorm2d into per-channel scale/bias (kept f32)
    inv_std = 1.0 / jnp.sqrt(running_var + eps)
    scale = (gamma * inv_std).reshape(1, Cout).astype(jnp.float32)
    bias = (beta - running_mean * gamma * inv_std).reshape(1, Cout).astype(jnp.float32)

    # images per grid step: target M = Nb*H*W >= ~1024 for small images, but keep
    # at least 2 grid steps when N >= 2 so pipelining / megacore has work.
    if images_per_step is None:
        nb = max(1, min(N, 1024 // max(1, H * W)))
        if N >= 2:
            nb = min(nb, max(1, N // 2))
        while N % nb:
            nb -= 1
    else:
        nb = images_per_step
        assert N % nb == 0, "images_per_step must divide the batch"

    out_nhwc = pl.pallas_call(
        _block_kernel,
        out_shape=jax.ShapeDtypeStruct((N, H, W, Cout), out_dtype),
        grid=(N // nb,),
        in_specs=[
            pl.BlockSpec((nb, H + 2, W + 2, Cin), lambda n: (n, 0, 0, 0)),
            pl.BlockSpec((3, 3 * Cin, Cout), lambda n: (0, 0, 0)),
            pl.BlockSpec((3, 3 * Cout, Cout), lambda n: (0, 0, 0)),
            pl.BlockSpec((1, Cout), lambda n: (0, 0)),
            pl.BlockSpec((1, Cout), lambda n: (0, 0)),
        ],
        out_specs=pl.BlockSpec((nb, H, W, Cout), lambda n: (n, 0, 0, 0)),
        compiler_params=pltpu.CompilerParams(
            dimension_semantics=("parallel",)),    # megacore split over batch groups
    )(x_pad, w1_k, w2_k, scale, bias)

    return jnp.transpose(out_nhwc, (0, 3, 1, 2))                      # back to NCHW


def block_reference(x_nchw, w1, w2, gamma, beta, rm, rv, eps=1e-5):
    """Pure-JAX reference mirroring the PyTorch forward (eval-mode BN)."""
    def conv(x, w):
        return jax.lax.conv_general_dilated(
            x, w, window_strides=(1, 1), padding=((1, 1), (1, 1)),
            dimension_numbers=('NCHW', 'OIHW', 'NCHW'),
            precision=jax.lax.Precision.HIGHEST)

    def bn2(x):
        s = (gamma / jnp.sqrt(rv + eps)).reshape(1, -1, 1, 1)
        b = (beta - rm * gamma / jnp.sqrt(rv + eps)).reshape(1, -1, 1, 1)
        return x * s + b

    identity = x_nchw
    h = jax.nn.relu(bn2(conv(x_nchw, w1)))
    h = bn2(conv(h, w2))
    return jax.nn.relu(h + identity)


if __name__ == "__main__":
    N, C, H, W = 2, 4, 16, 16    # in_channels == out_channels, stride=1

    key = jax.random.PRNGKey(0)
    k_x, k_w1, k_w2, k_g, k_b, k_rm, k_rv = jax.random.split(key, 7)

    x = jax.random.normal(k_x, (N, C, H, W), jnp.float32)
    w1 = jax.random.normal(k_w1, (C, C, 3, 3), jnp.float32) * 0.1
    w2 = jax.random.normal(k_w2, (C, C, 3, 3), jnp.float32) * 0.1
    gamma = jax.random.uniform(k_g, (C,), jnp.float32, 0.5, 1.5)
    beta = jax.random.normal(k_b, (C,), jnp.float32) * 0.1
    running_mean = jax.random.normal(k_rm, (C,), jnp.float32) * 0.1
    running_var = jax.random.uniform(k_rv, (C,), jnp.float32, 0.5, 1.5)

    ref = block_reference(x, w1, w2, gamma, beta, running_mean, running_var)

    # default path: bf16 matmul operands, f32 accumulation / residual / epilogues
    out_bf16 = block_forward(x, w1, w2, gamma, beta, running_mean, running_var)
    out_bf16 = jax.block_until_ready(out_bf16)
    np.testing.assert_allclose(np.asarray(out_bf16), np.asarray(ref),
                               rtol=5e-2, atol=5e-2)

    # full-f32 path: tight tolerance check of the kernel structure
    out_f32 = block_forward(x, w1, w2, gamma, beta, running_mean, running_var,
                            compute_dtype=jnp.float32)
    out_f32 = jax.block_until_ready(out_f32)
    np.testing.assert_allclose(np.asarray(out_f32), np.asarray(ref),
                               rtol=2e-3, atol=2e-3)

    print("KERNEL_OK")
</pallas_src>

<mosaic_0001>
module attributes {stable_mosaic.version = 11 : i64} {
  func.func @_block_kernel(%arg0: i32, %arg1: memref<1x18x18x4xf32, #tpu.memory_space<vmem>>, %arg2: memref<3x12x4xbf16, #tpu.memory_space<vmem>>, %arg3: memref<3x12x4xbf16, #tpu.memory_space<vmem>>, %arg4: memref<1x4xf32, #tpu.memory_space<vmem>>, %arg5: memref<1x4xf32, #tpu.memory_space<vmem>>, %arg6: memref<1x16x16x4xf32, #tpu.memory_space<vmem>>) attributes {dimension_semantics = [#tpu.dimension_semantics<parallel>], iteration_bounds = array<i64: 2>, scalar_prefetch = 0 : i64, scratch_operands = 0 : i64, tpu.core_type = #tpu.core_type<tc>, window_params = [{transform_indices = @transform_0, window_bounds = array<i64: 1, 18, 18, 4>}, {pipeline_mode = #tpu.pipeline_mode<synchronous>, transform_indices = @transform_1, window_bounds = array<i64: 3, 12, 4>}, {pipeline_mode = #tpu.pipeline_mode<synchronous>, transform_indices = @transform_2, window_bounds = array<i64: 3, 12, 4>}, {pipeline_mode = #tpu.pipeline_mode<synchronous>, transform_indices = @transform_3, window_bounds = array<i64: 1, 4>}, {pipeline_mode = #tpu.pipeline_mode<synchronous>, transform_indices = @transform_4, window_bounds = array<i64: 1, 4>}, {transform_indices = @transform_5, window_bounds = array<i64: 1, 16, 16, 4>}]} {
    %c0 = arith.constant 0 : index
    %c0_0 = arith.constant 0 : index
    %0 = vector.load %arg4[%c0, %c0_0] : memref<1x4xf32, #tpu.memory_space<vmem>>, vector<1x4xf32>
    %c0_1 = arith.constant 0 : index
    %c0_2 = arith.constant 0 : index
    %1 = vector.load %arg5[%c0_1, %c0_2] : memref<1x4xf32, #tpu.memory_space<vmem>>, vector<1x4xf32>
    %c0_3 = arith.constant 0 : index
    %c0_4 = arith.constant 0 : index
    %c0_5 = arith.constant 0 : index
    %c0_6 = arith.constant 0 : index
    %2 = vector.load %arg1[%c0_3, %c0_4, %c0_5, %c0_6] : memref<1x18x18x4xf32, #tpu.memory_space<vmem>>, vector<1x18x18x4xf32>
    %3 = vector.extract_strided_slice %2 {offsets = [0, 0, 0, 0], sizes = [1, 16, 18, 4], strides = [1, 1, 1, 1]} : vector<1x18x18x4xf32> to vector<1x16x18x4xf32>
    %4 = arith.truncf %3 : vector<1x16x18x4xf32> to vector<1x16x18x4xbf16>
    %5 = vector.extract_strided_slice %4 {offsets = [0, 0, 0, 0], sizes = [1, 16, 16, 4], strides = [1, 1, 1, 1]} : vector<1x16x18x4xbf16> to vector<1x16x16x4xbf16>
    %6 = vector.extract_strided_slice %4 {offsets = [0, 0, 1, 0], sizes = [1, 16, 16, 4], strides = [1, 1, 1, 1]} : vector<1x16x18x4xbf16> to vector<1x16x16x4xbf16>
    %7 = vector.extract_strided_slice %4 {offsets = [0, 0, 2, 0], sizes = [1, 16, 16, 4], strides = [1, 1, 1, 1]} : vector<1x16x18x4xbf16> to vector<1x16x16x4xbf16>
    %8 = tpu.concatenate %5, %6, %7 in 3 : vector<1x16x16x4xbf16>, vector<1x16x16x4xbf16>, vector<1x16x16x4xbf16> -> vector<1x16x16x12xbf16>
    %9 = vector.shape_cast %8 : vector<1x16x16x12xbf16> to vector<256x12xbf16>
    %c0_7 = arith.constant 0 : index
    %c0_8 = arith.constant 0 : index
    %c0_9 = arith.constant 0 : index
    %10 = vector.load %arg2[%c0_7, %c0_8, %c0_9] : memref<3x12x4xbf16, #tpu.memory_space<vmem>>, vector<1x12x4xbf16>
    %11 = vector.shape_cast %10 : vector<1x12x4xbf16> to vector<12x4xbf16>
    %cst = arith.constant dense<0.000000e+00> : vector<256x4xf32>
    %12 = tpu.matmul %9, %11, %cst {dimension_numbers = #tpu.dot_dimension_numbers<[1], [0], [0], [1], [0, 0, 1, 1], [], []>} : vector<256x12xbf16>, vector<12x4xbf16>, vector<256x4xf32> -> vector<256x4xf32>
    %13 = vector.extract_strided_slice %2 {offsets = [0, 1, 0, 0], sizes = [1, 16, 18, 4], strides = [1, 1, 1, 1]} : vector<1x18x18x4xf32> to vector<1x16x18x4xf32>
    %14 = arith.truncf %13 : vector<1x16x18x4xf32> to vector<1x16x18x4xbf16>
    %15 = vector.extract_strided_slice %14 {offsets = [0, 0, 0, 0], sizes = [1, 16, 16, 4], strides = [1, 1, 1, 1]} : vector<1x16x18x4xbf16> to vector<1x16x16x4xbf16>
    %16 = vector.extract_strided_slice %14 {offsets = [0, 0, 1, 0], sizes = [1, 16, 16, 4], strides = [1, 1, 1, 1]} : vector<1x16x18x4xbf16> to vector<1x16x16x4xbf16>
    %17 = vector.extract_strided_slice %14 {offsets = [0, 0, 2, 0], sizes = [1, 16, 16, 4], strides = [1, 1, 1, 1]} : vector<1x16x18x4xbf16> to vector<1x16x16x4xbf16>
    %18 = tpu.concatenate %15, %16, %17 in 3 : vector<1x16x16x4xbf16>, vector<1x16x16x4xbf16>, vector<1x16x16x4xbf16> -> vector<1x16x16x12xbf16>
    %19 = vector.shape_cast %18 : vector<1x16x16x12xbf16> to vector<256x12xbf16>
    %c1 = arith.constant 1 : index
    %c0_10 = arith.constant 0 : index
    %c0_11 = arith.constant 0 : index
    %20 = vector.load %arg2[%c1, %c0_10, %c0_11] : memref<3x12x4xbf16, #tpu.memory_space<vmem>>, vector<1x12x4xbf16>
    %21 = vector.shape_cast %20 : vector<1x12x4xbf16> to vector<12x4xbf16>
    %cst_12 = arith.constant dense<0.000000e+00> : vector<256x4xf32>
    %22 = tpu.matmul %19, %21, %cst_12 {dimension_numbers = #tpu.dot_dimension_numbers<[1], [0], [0], [1], [0, 0, 1, 1], [], []>} : vector<256x12xbf16>, vector<12x4xbf16>, vector<256x4xf32> -> vector<256x4xf32>
    %23 = arith.addf %12, %22 : vector<256x4xf32>
    %24 = vector.extract_strided_slice %2 {offsets = [0, 2, 0, 0], sizes = [1, 16, 18, 4], strides = [1, 1, 1, 1]} : vector<1x18x18x4xf32> to vector<1x16x18x4xf32>
    %25 = arith.truncf %24 : vector<1x16x18x4xf32> to vector<1x16x18x4xbf16>
    %26 = vector.extract_strided_slice %25 {offsets = [0, 0, 0, 0], sizes = [1, 16, 16, 4], strides = [1, 1, 1, 1]} : vector<1x16x18x4xbf16> to vector<1x16x16x4xbf16>
    %27 = vector.extract_strided_slice %25 {offsets = [0, 0, 1, 0], sizes = [1, 16, 16, 4], strides = [1, 1, 1, 1]} : vector<1x16x18x4xbf16> to vector<1x16x16x4xbf16>
    %28 = vector.extract_strided_slice %25 {offsets = [0, 0, 2, 0], sizes = [1, 16, 16, 4], strides = [1, 1, 1, 1]} : vector<1x16x18x4xbf16> to vector<1x16x16x4xbf16>
    %29 = tpu.concatenate %26, %27, %28 in 3 : vector<1x16x16x4xbf16>, vector<1x16x16x4xbf16>, vector<1x16x16x4xbf16> -> vector<1x16x16x12xbf16>
    %30 = vector.shape_cast %29 : vector<1x16x16x12xbf16> to vector<256x12xbf16>
    %c2 = arith.constant 2 : index
    %c0_13 = arith.constant 0 : index
    %c0_14 = arith.constant 0 : index
    %31 = vector.load %arg2[%c2, %c0_13, %c0_14] : memref<3x12x4xbf16, #tpu.memory_space<vmem>>, vector<1x12x4xbf16>
    %32 = vector.shape_cast %31 : vector<1x12x4xbf16> to vector<12x4xbf16>
    %cst_15 = arith.constant dense<0.000000e+00> : vector<256x4xf32>
    %33 = tpu.matmul %30, %32, %cst_15 {dimension_numbers = #tpu.dot_dimension_numbers<[1], [0], [0], [1], [0, 0, 1, 1], [], []>} : vector<256x12xbf16>, vector<12x4xbf16>, vector<256x4xf32> -> vector<256x4xf32>
    %34 = arith.addf %23, %33 : vector<256x4xf32>
    %35 = vector.broadcast %0 : vector<1x4xf32> to vector<256x4xf32>
    %36 = arith.mulf %34, %35 : vector<256x4xf32>
    %37 = vector.broadcast %1 : vector<1x4xf32> to vector<256x4xf32>
    %38 = arith.addf %36, %37 : vector<256x4xf32>
    %cst_16 = arith.constant 0.000000e+00 : f32
    %39 = vector.broadcast %cst_16 : f32 to vector<256x4xf32>
    %40 = arith.maximumf %38, %39 : vector<256x4xf32>
    %41 = vector.shape_cast %40 : vector<256x4xf32> to vector<1x16x16x4xf32>
    %42 = arith.truncf %41 : vector<1x16x16x4xf32> to vector<1x16x16x4xbf16>
    %cst_17 = arith.constant 0.000000e+00 : bf16
    %43 = vector.broadcast %cst_17 : bf16 to vector<1x16x1x4xbf16>
    %cst_18 = arith.constant 0.000000e+00 : bf16
    %44 = vector.broadcast %cst_18 : bf16 to vector<1x1x18x4xbf16>
    %45 = tpu.concatenate %43, %42, %43 in 2 : vector<1x16x1x4xbf16>, vector<1x16x16x4xbf16>, vector<1x16x1x4xbf16> -> vector<1x16x18x4xbf16>
    %46 = tpu.concatenate %44, %45, %44 in 1 : vector<1x1x18x4xbf16>, vector<1x16x18x4xbf16>, vector<1x1x18x4xbf16> -> vector<1x18x18x4xbf16>
    %47 = vector.extract_strided_slice %46 {offsets = [0, 0, 0, 0], sizes = [1, 16, 18, 4], strides = [1, 1, 1, 1]} : vector<1x18x18x4xbf16> to vector<1x16x18x4xbf16>
    %48 = vector.extract_strided_slice %47 {offsets = [0, 0, 0, 0], sizes = [1, 16, 16, 4], strides = [1, 1, 1, 1]} : vector<1x16x18x4xbf16> to vector<1x16x16x4xbf16>
    %49 = vector.extract_strided_slice %47 {offsets = [0, 0, 1, 0], sizes = [1, 16, 16, 4], strides = [1, 1, 1, 1]} : vector<1x16x18x4xbf16> to vector<1x16x16x4xbf16>
    %50 = vector.extract_strided_slice %47 {offsets = [0, 0, 2, 0], sizes = [1, 16, 16, 4], strides = [1, 1, 1, 1]} : vector<1x16x18x4xbf16> to vector<1x16x16x4xbf16>
    %51 = tpu.concatenate %48, %49, %50 in 3 : vector<1x16x16x4xbf16>, vector<1x16x16x4xbf16>, vector<1x16x16x4xbf16> -> vector<1x16x16x12xbf16>
    %52 = vector.shape_cast %51 : vector<1x16x16x12xbf16> to vector<256x12xbf16>
    %c0_19 = arith.constant 0 : index
    %c0_20 = arith.constant 0 : index
    %c0_21 = arith.constant 0 : index
    %53 = vector.load %arg3[%c0_19, %c0_20, %c0_21] : memref<3x12x4xbf16, #tpu.memory_space<vmem>>, vector<1x12x4xbf16>
    %54 = vector.shape_cast %53 : vector<1x12x4xbf16> to vector<12x4xbf16>
    %cst_22 = arith.constant dense<0.000000e+00> : vector<256x4xf32>
    %55 = tpu.matmul %52, %54, %cst_22 {dimension_numbers = #tpu.dot_dimension_numbers<[1], [0], [0], [1], [0, 0, 1, 1], [], []>} : vector<256x12xbf16>, vector<12x4xbf16>, vector<256x4xf32> -> vector<256x4xf32>
    %56 = vector.extract_strided_slice %46 {offsets = [0, 1, 0, 0], sizes = [1, 16, 18, 4], strides = [1, 1, 1, 1]} : vector<1x18x18x4xbf16> to vector<1x16x18x4xbf16>
    %57 = vector.extract_strided_slice %56 {offsets = [0, 0, 0, 0], sizes = [1, 16, 16, 4], strides = [1, 1, 1, 1]} : vector<1x16x18x4xbf16> to vector<1x16x16x4xbf16>
    %58 = vector.extract_strided_slice %56 {offsets = [0, 0, 1, 0], sizes = [1, 16, 16, 4], strides = [1, 1, 1, 1]} : vector<1x16x18x4xbf16> to vector<1x16x16x4xbf16>
    %59 = vector.extract_strided_slice %56 {offsets = [0, 0, 2, 0], sizes = [1, 16, 16, 4], strides = [1, 1, 1, 1]} : vector<1x16x18x4xbf16> to vector<1x16x16x4xbf16>
    %60 = tpu.concatenate %57, %58, %59 in 3 : vector<1x16x16x4xbf16>, vector<1x16x16x4xbf16>, vector<1x16x16x4xbf16> -> vector<1x16x16x12xbf16>
    %61 = vector.shape_cast %60 : vector<1x16x16x12xbf16> to vector<256x12xbf16>
    %c1_23 = arith.constant 1 : index
    %c0_24 = arith.constant 0 : index
    %c0_25 = arith.constant 0 : index
    %62 = vector.load %arg3[%c1_23, %c0_24, %c0_25] : memref<3x12x4xbf16, #tpu.memory_space<vmem>>, vector<1x12x4xbf16>
    %63 = vector.shape_cast %62 : vector<1x12x4xbf16> to vector<12x4xbf16>
    %cst_26 = arith.constant dense<0.000000e+00> : vector<256x4xf32>
    %64 = tpu.matmul %61, %63, %cst_26 {dimension_numbers = #tpu.dot_dimension_numbers<[1], [0], [0], [1], [0, 0, 1, 1], [], []>} : vector<256x12xbf16>, vector<12x4xbf16>, vector<256x4xf32> -> vector<256x4xf32>
    %65 = arith.addf %55, %64 : vector<256x4xf32>
    %66 = vector.extract_strided_slice %46 {offsets = [0, 2, 0, 0], sizes = [1, 16, 18, 4], strides = [1, 1, 1, 1]} : vector<1x18x18x4xbf16> to vector<1x16x18x4xbf16>
    %67 = vector.extract_strided_slice %66 {offsets = [0, 0, 0, 0], sizes = [1, 16, 16, 4], strides = [1, 1, 1, 1]} : vector<1x16x18x4xbf16> to vector<1x16x16x4xbf16>
    %68 = vector.extract_strided_slice %66 {offsets = [0, 0, 1, 0], sizes = [1, 16, 16, 4], strides = [1, 1, 1, 1]} : vector<1x16x18x4xbf16> to vector<1x16x16x4xbf16>
    %69 = vector.extract_strided_slice %66 {offsets = [0, 0, 2, 0], sizes = [1, 16, 16, 4], strides = [1, 1, 1, 1]} : vector<1x16x18x4xbf16> to vector<1x16x16x4xbf16>
    %70 = tpu.concatenate %67, %68, %69 in 3 : vector<1x16x16x4xbf16>, vector<1x16x16x4xbf16>, vector<1x16x16x4xbf16> -> vector<1x16x16x12xbf16>
    %71 = vector.shape_cast %70 : vector<1x16x16x12xbf16> to vector<256x12xbf16>
    %c2_27 = arith.constant 2 : index
    %c0_28 = arith.constant 0 : index
    %c0_29 = arith.constant 0 : index
    %72 = vector.load %arg3[%c2_27, %c0_28, %c0_29] : memref<3x12x4xbf16, #tpu.memory_space<vmem>>, vector<1x12x4xbf16>
    %73 = vector.shape_cast %72 : vector<1x12x4xbf16> to vector<12x4xbf16>
    %cst_30 = arith.constant dense<0.000000e+00> : vector<256x4xf32>
    %74 = tpu.matmul %71, %73, %cst_30 {dimension_numbers = #tpu.dot_dimension_numbers<[1], [0], [0], [1], [0, 0, 1, 1], [], []>} : vector<256x12xbf16>, vector<12x4xbf16>, vector<256x4xf32> -> vector<256x4xf32>
    %75 = arith.addf %65, %74 : vector<256x4xf32>
    %76 = vector.broadcast %0 : vector<1x4xf32> to vector<256x4xf32>
    %77 = arith.mulf %75, %76 : vector<256x4xf32>
    %78 = vector.broadcast %1 : vector<1x4xf32> to vector<256x4xf32>
    %79 = arith.addf %77, %78 : vector<256x4xf32>
    %80 = vector.extract_strided_slice %2 {offsets = [0, 1, 1, 0], sizes = [1, 16, 16, 4], strides = [1, 1, 1, 1]} : vector<1x18x18x4xf32> to vector<1x16x16x4xf32>
    %81 = vector.shape_cast %80 : vector<1x16x16x4xf32> to vector<256x4xf32>
    %82 = arith.addf %79, %81 : vector<256x4xf32>
    %cst_31 = arith.constant 0.000000e+00 : f32
    %83 = vector.broadcast %cst_31 : f32 to vector<256x4xf32>
    %84 = arith.maximumf %82, %83 : vector<256x4xf32>
    %85 = vector.shape_cast %84 : vector<256x4xf32> to vector<1x16x16x4xf32>
    %c0_32 = arith.constant 0 : index
    %c0_33 = arith.constant 0 : index
    %c0_34 = arith.constant 0 : index
    %c0_35 = arith.constant 0 : index
    %86 = vector.load %arg6[%c0_32, %c0_33, %c0_34, %c0_35] : memref<1x16x16x4xf32, #tpu.memory_space<vmem>>, vector<1x16x16x4xf32>
    tpu.vector_store %arg6[%c0_32, %c0_33, %c0_34, %c0_35], %85 {strides = array<i32>} : memref<1x16x16x4xf32, #tpu.memory_space<vmem>>, vector<1x16x16x4xf32>,
    return
  }
  func.func @transform_0(%arg0: i32) -> (i32, i32, i32, i32) {
    %c0_i32 = arith.constant 0 : i32
    %c0_i32_0 = arith.constant 0 : i32
    %c0_i32_1 = arith.constant 0 : i32
    %c0_i32_2 = arith.constant 0 : i32
    return %arg0, %c0_i32, %c0_i32_0, %c0_i32_1 : i32, i32, i32, i32
  }
  func.func @transform_1(%arg0: i32) -> (i32, i32, i32) {
    %c0_i32 = arith.constant 0 : i32
    %c0_i32_0 = arith.constant 0 : i32
    %c0_i32_1 = arith.constant 0 : i32
    %c0_i32_2 = arith.constant 0 : i32
    return %c0_i32, %c0_i32_0, %c0_i32_1 : i32, i32, i32
  }
  func.func @transform_2(%arg0: i32) -> (i32, i32, i32) {
    %c0_i32 = arith.constant 0 : i32
    %c0_i32_0 = arith.constant 0 : i32
    %c0_i32_1 = arith.constant 0 : i32
    %c0_i32_2 = arith.constant 0 : i32
    return %c0_i32, %c0_i32_0, %c0_i32_1 : i32, i32, i32
  }
  func.func @transform_3(%arg0: i32) -> (i32, i32) {
    %c0_i32 = arith.constant 0 : i32
    %c0_i32_0 = arith.constant 0 : i32
    %c0_i32_1 = arith.constant 0 : i32
    return %c0_i32, %c0_i32_0 : i32, i32
  }
  func.func @transform_4(%arg0: i32) -> (i32, i32) {
    %c0_i32 = arith.constant 0 : i32
    %c0_i32_0 = arith.constant 0 : i32
    %c0_i32_1 = arith.constant 0 : i32
    return %c0_i32, %c0_i32_0 : i32, i32
  }
  func.func @transform_5(%arg0: i32) -> (i32, i32, i32, i32) {
    %c0_i32 = arith.constant 0 : i32
    %c0_i32_0 = arith.constant 0 : i32
    %c0_i32_1 = arith.constant 0 : i32
    %c0_i32_2 = arith.constant 0 : i32
    return %arg0, %c0_i32, %c0_i32_0, %c0_i32_1 : i32, i32, i32, i32
  }
}

</mosaic_0001>

<llo_original>
// kernel: tpu_custom_call.1
$region0: #{tpu_custom_call.1}
  #allocation0 [shape = 'u32[]', space=smem, size = 0x4, offset = 0x4, fixed_abs, tag = 'smem constant byte address 0x4 - core index']
  #allocation1 [shape = 'u32[72,128]{1,0:T(1,128)}', space=vmem, size = 0x9000, scoped, tag = 'internal scratch']
  %s0 = inlined_call_operand.vmem [shape: f32[2,18,18,4], index: 0, kind: input, shape index: {}]
  %s1 = inlined_call_operand.vmem [shape: bf16[3,12,4], index: 1, kind: input, shape index: {}]
  %s2 = inlined_call_operand.vmem [shape: bf16[3,12,4], index: 2, kind: input, shape index: {}]
  %s3 = inlined_call_operand.vmem [shape: f32[1,4], index: 3, kind: input, shape index: {}]
  %s4 = inlined_call_operand.vmem [shape: f32[1,4], index: 4, kind: input, shape index: {}]
  %s5 = inlined_call_operand.vmem [shape: f32[2,16,16,4], index: 5, kind: output, shape index: {}]
  %s6 = sld [smem:[#allocation0]]
  $region53: #{tpu_custom_call.1} parent=0
    _
  %s8 = ssub.s32 1, %s6
  %s9 = scalar_select 0, %s8, %s6
  loop: start=0, step=1, limit=4
  $region2: #{tpu_custom_call.1} parent=0 // loop_pre_header
    _
  $region3: #{tpu_custom_call.1} parent=0 // loop_header
    %s11 = sphi 0, %s15
    %p12 = scmp.ge.s32.totalorder %s11, 4
    %s21 = sphi 0, %s23
    %s24 = sphi 0, %s21
    %s25 = sphi 0, %s24
    %s41 = sphi 0, %s25
    %s45 = sphi 0, %s45
    %s47 = sphi 0, %s45
    %s48 = sphi 0, %s47
    %s62 = sphi 0, %s48
    %s66 = sphi 0, %s66
    %s68 = sphi 0, %s66
    %s69 = sphi 0, %s68
    %s83 = sphi 0, %s69
    %s87 = sphi 0, %s87
    %s89 = sphi 0, %s87
    %s90 = sphi 0, %s89
    %s104 = sphi 0, %s90
    %s108 = sphi 0, %s108
    %s110 = sphi 0, %s108
    %s111 = sphi 0, %s110
    %s125 = sphi 0, %s111
    %s131 = sphi 0, %s133
    %s134 = sphi 0, %s131
    %s135 = sphi 0, %s134
    %s151 = sphi 0, %s135
  $region4: #{tpu_custom_call.1} parent=0 // loop_header_branch
    %14 = sbr.rel (%p12) target = $region8
  $region5: #{tpu_custom_call.1} parent=0 // loop_body
    %s16 = ssub.s32 %s11, 1
    %s17 = ssub.s32 %s11, 2
    %s18 = sadd.s32 %s11, 1
    %s19 = ssub.s32 %s11, %s18
    %p20 = scmp.eq.s32.totalorder %s19, 0
    %s22 = sadd.s32 %s21, 1
    %s23 = scalar_select %p20, %s21, %s22
    %p26 = pneg %p20
    %p27 = scmp.eq.s32.totalorder %s11, 1
    %p28 = por %p26, %p27
    %p29 = scmp.ne.s32.totalorder %s21, %s24
    %p30 = scmp.eq.s32.totalorder %s11, 0
    %p31 = por %p29, %p30
    %p32 = scmp.ne.s32.totalorder %s21, %s24
    %p33 = scmp.eq.s32.totalorder %s16, 1
    %p34 = por %p32, %p33
    %p35 = scmp.ne.s32.totalorder %s24, %s25
    %p36 = scmp.eq.s32.totalorder %s16, 0
    %p37 = por %p35, %p36
    %p38 = scmp.ne.s32.totalorder %s24, %s25
    %p39 = scmp.eq.s32.totalorder %s17, 1
    %p40 = por %p38, %p39
    %p42 = scmp.ne.s32.totalorder %s25, %s41
    %p43 = scmp.eq.s32.totalorder %s17, 0
    %p44 = por %p42, %p43
    %s46 = sadd.s32 %s45, 1
    %p49 = scmp.eq.s32.totalorder %s11, 1
    %p50 = scmp.ne.s32.totalorder %s45, %s47
    %p51 = scmp.eq.s32.totalorder %s11, 0
    %p52 = por %p50, %p51
    %p53 = scmp.ne.s32.totalorder %s45, %s47
    %p54 = scmp.eq.s32.totalorder %s16, 1
    %p55 = por %p53, %p54
    %p56 = scmp.ne.s32.totalorder %s47, %s48
    %p57 = scmp.eq.s32.totalorder %s16, 0
    %p58 = por %p56, %p57
    %p59 = scmp.ne.s32.totalorder %s47, %s48
    %p60 = scmp.eq.s32.totalorder %s17, 1
    %p61 = por %p59, %p60
    %p63 = scmp.ne.s32.totalorder %s48, %s62
    %p64 = scmp.eq.s32.totalorder %s17, 0
    %p65 = por %p63, %p64
    %s67 = sadd.s32 %s66, 1
    %p70 = scmp.eq.s32.totalorder %s11, 1
    %p71 = scmp.ne.s32.totalorder %s66, %s68
    %p72 = scmp.eq.s32.totalorder %s11, 0
    %p73 = por %p71, %p72
    %p74 = scmp.ne.s32.totalorder %s66, %s68
    %p75 = scmp.eq.s32.totalorder %s16, 1
    %p76 = por %p74, %p75
    %p77 = scmp.ne.s32.totalorder %s68, %s69
    %p78 = scmp.eq.s32.totalorder %s16, 0
    %p79 = por %p77, %p78
    %p80 = scmp.ne.s32.totalorder %s68, %s69
    %p81 = scmp.eq.s32.totalorder %s17, 1
    %p82 = por %p80, %p81
    %p84 = scmp.ne.s32.totalorder %s69, %s83
    %p85 = scmp.eq.s32.totalorder %s17, 0
    %p86 = por %p84, %p85
    %s88 = sadd.s32 %s87, 1
    %p91 = scmp.eq.s32.totalorder %s11, 1
    %p92 = scmp.ne.s32.totalorder %s87, %s89
    %p93 = scmp.eq.s32.totalorder %s11, 0
    %p94 = por %p92, %p93
    %p95 = scmp.ne.s32.totalorder %s87, %s89
    %p96 = scmp.eq.s32.totalorder %s16, 1
    %p97 = por %p95, %p96
    %p98 = scmp.ne.s32.totalorder %s89, %s90
    %p99 = scmp.eq.s32.totalorder %s16, 0
    %p100 = por %p98, %p99
    %p101 = scmp.ne.s32.totalorder %s89, %s90
    %p102 = scmp.eq.s32.totalorder %s17, 1
    %p103 = por %p101, %p102
    %p105 = scmp.ne.s32.totalorder %s90, %s104
    %p106 = scmp.eq.s32.totalorder %s17, 0
    %p107 = por %p105, %p106
    %s109 = sadd.s32 %s108, 1
    %p112 = scmp.eq.s32.totalorder %s11, 1
    %p113 = scmp.ne.s32.totalorder %s108, %s110
    %p114 = scmp.eq.s32.totalorder %s11, 0
    %p115 = por %p113, %p114
    %p116 = scmp.ne.s32.totalorder %s108, %s110
    %p117 = scmp.eq.s32.totalorder %s16, 1
    %p118 = por %p116, %p117
    %p119 = scmp.ne.s32.totalorder %s110, %s111
    %p120 = scmp.eq.s32.totalorder %s16, 0
    %p121 = por %p119, %p120
    %p122 = scmp.ne.s32.totalorder %s110, %s111
    %p123 = scmp.eq.s32.totalorder %s17, 1
    %p124 = por %p122, %p123
    %p126 = scmp.ne.s32.totalorder %s111, %s125
    %p127 = scmp.eq.s32.totalorder %s17, 0
    %p128 = por %p126, %p127
    %s129 = ssub.s32 %s11, %s18
    %p130 = scmp.eq.s32.totalorder %s129, 0
    %s132 = sadd.s32 %s131, 1
    %s133 = scalar_select %p130, %s131, %s132
    %p136 = pneg %p130
    %p137 = scmp.eq.s32.totalorder %s11, 1
    %p138 = por %p136, %p137
    %p139 = scmp.ne.s32.totalorder %s131, %s134
    %p140 = scmp.eq.s32.totalorder %s11, 0
    %p141 = por %p139, %p140
    %p142 = scmp.ne.s32.totalorder %s131, %s134
    %p143 = scmp.eq.s32.totalorder %s16, 1
    %p144 = por %p142, %p143
    %p145 = scmp.ne.s32.totalorder %s134, %s135
    %p146 = scmp.eq.s32.totalorder %s16, 0
    %p147 = por %p145, %p146
    %p148 = scmp.ne.s32.totalorder %s134, %s135
    %p149 = scmp.eq.s32.totalorder %s17, 1
    %p150 = por %p148, %p149
    %p152 = scmp.ne.s32.totalorder %s135, %s151
    %p153 = scmp.eq.s32.totalorder %s17, 0
    %p154 = por %p152, %p153
    %p155 = scmp.le.s32.totalorder 1, %s11
    %p156 = scmp.lt.s32.totalorder %s11, 3
    %p157 = pnand %p155, %p156
    %p158 = pneg %p157
    // Predicated region
    $region9: #{tpu_custom_call.1} parent=5 // pred_check
      _
    $region10: #{tpu_custom_call.1} parent=5 // pred_check_branch
      %160 = sbr.rel (%p157) target = $region12
    $region11: #{tpu_custom_call.1} parent=5 // pred_region
      %s161 = ssub.s32 %s11, 1
      // Predicated region
      $region13: #{tpu_custom_call.1} parent=11 // pred_check
        %p162 = pneg %p58
      $region14: #{tpu_custom_call.1} parent=11 // pred_check_branch
        %164 = sbr.rel (%p162) target = $region16
      $region15: #{tpu_custom_call.1} parent=11 // pred_region
        _
      $region16: #{tpu_custom_call.1} parent=11 // pred_fallthru
        _
      // Predicated region
      $region17: #{tpu_custom_call.1} parent=11 // pred_check
        %p165 = pneg %p79
      $region18: #{tpu_custom_call.1} parent=11 // pred_check_branch
        %167 = sbr.rel (%p165) target = $region20
      $region19: #{tpu_custom_call.1} parent=11 // pred_region
        _
      $region20: #{tpu_custom_call.1} parent=11 // pred_fallthru
        _
      // Predicated region
      $region21: #{tpu_custom_call.1} parent=11 // pred_check
        %p168 = pneg %p100
      $region22: #{tpu_custom_call.1} parent=11 // pred_check_branch
        %170 = sbr.rel (%p168) target = $region24
      $region23: #{tpu_custom_call.1} parent=11 // pred_region
        _
      $region24: #{tpu_custom_call.1} parent=11 // pred_fallthru
        _
      // Predicated region
      $region25: #{tpu_custom_call.1} parent=11 // pred_check
        %p171 = pneg %p121
      $region26: #{tpu_custom_call.1} parent=11 // pred_check_branch
        %173 = sbr.rel (%p171) target = $region28
      $region27: #{tpu_custom_call.1} parent=11 // pred_region
        _
      $region28: #{tpu_custom_call.1} parent=11 // pred_fallthru
        _
    $region12: #{tpu_custom_call.1} parent=5 // pred_fallthru
      _
    %p174 = scmp.lt.s32.totalorder %s11, 2
    // Predicated region
    $region29: #{tpu_custom_call.1} parent=5 // pred_check
      %p175 = pneg %p174
    $region30: #{tpu_custom_call.1} parent=5 // pred_check_branch
      %177 = sbr.rel (%p175) target = $region32
    $region31: #{tpu_custom_call.1} parent=5 // pred_region
      // Predicated region
      $region33: #{tpu_custom_call.1} parent=31 // pred_check
        %p178 = pneg %p31
      $region34: #{tpu_custom_call.1} parent=31 // pred_check_branch
        %180 = sbr.rel (%p178) target = $region36
      $region35: #{tpu_custom_call.1} parent=31 // pred_region
        %p181 = scmp.lt.s32.totalorder %s11, 1
        %s182 = scalar_select %p181, %s11, 1
        %s183 = smul.addr %s182, 54
        %s184 = smul.addr %s183, 8
        %s185 = scalar_lea.vmem %s0, %s184
      $region36: #{tpu_custom_call.1} parent=31 // pred_fallthru
        _
    $region32: #{tpu_custom_call.1} parent=5 // pred_fallthru
      _
    %p186 = scmp.le.s32.totalorder 1, %s11
    %p187 = scmp.lt.s32.totalorder %s11, 3
    %p188 = pnand %p186, %p187
    %p189 = pneg %p188
    // Predicated region
    $region37: #{tpu_custom_call.1} parent=5 // pred_check
      _
    $region38: #{tpu_custom_call.1} parent=5 // pred_check_branch
      %191 = sbr.rel (%p188) target = $region40
    $region39: #{tpu_custom_call.1} parent=5 // pred_region
      %s192 = ssub.s32 %s11, 1
      %p193 = scmp.lt.s32.totalorder %s16, 1
      %s194 = scalar_select %p193, %s16, 1
      %s195 = smul.addr %s194, 54
      %s196 = smul.addr %s195, 8
      %s197 = scalar_lea.vmem %s0, %s196
      %p198 = pneg %p37
      %p199 = pneg %p34
      %p200 = pneg %p58
      %p201 = pneg %p55
      %p202 = pneg %p79
      %p203 = pneg %p76
      %p204 = pneg %p100
      %p205 = pneg %p97
      %p206 = pneg %p121
      %p207 = pneg %p118
      %p208 = pneg %p147
      %p209 = pneg %p144
      %p210 = scmp.lt.s32.totalorder %s16, 1
      %s211 = scalar_select %p210, %s16, 1
      %s212 = smul.addr %s211, 32
      %s213 = smul.addr %s212, 8
      %s214 = scalar_lea.vmem %s5, %s213
      %p215 = scmp.lt.s32.totalorder %s16, 1
      %s216 = scalar_select %p215, %s16, 1
      %s217 = smul.addr %s216, 54
      %s218 = smul.addr %s217, 8
      %s219 = scalar_lea.vmem %s0, %s218
      %p220 = scmp.lt.s32.totalorder %s16, 1
      %s221 = scalar_select %p220, %s16, 1
      %s222 = smul.addr %s221, 32
      %s223 = smul.addr %s222, 8
      %s224 = scalar_lea.vmem %s5, %s223
      %v226 = vld [vmem:[%s3] sm:$0x1]
      %v227 = vld [vmem:[%s4] sm:$0x1]
      %v228 = vld [vmem:[%s219] sm:$0xff]
      %v229 = vld [vmem:[%s219 + $0x8] sm:$0xff]
      %v230 = vld [vmem:[%s219 + $0x10] sm:$0x3]
      %v231 = vld [vmem:[%s219 + $0x18] sm:$0xff]
      %v232 = vld [vmem:[%s219 + $0x20] sm:$0xff]
      %v233 = vld [vmem:[%s219 + $0x28] sm:$0x3]
      %v234 = vld [vmem:[%s219 + $0x30] sm:$0xff]
      %v235 = vld [vmem:[%s219 + $0x38] sm:$0xff]
      %v236 = vld [vmem:[%s219 + $0x40] sm:$0x3]
      %v237 = vld [vmem:[%s219 + $0x48] sm:$0xff]
      %v238 = vld [vmem:[%s219 + $0x50] sm:$0xff]
      %v239 = vld [vmem:[%s219 + $0x58] sm:$0x3]
      %v240 = vld [vmem:[%s219 + $0x60] sm:$0xff]
      %v241 = vld [vmem:[%s219 + $0x68] sm:$0xff]
      %v242 = vld [vmem:[%s219 + $0x70] sm:$0x3]
      %v243 = vld [vmem:[%s219 + $0x78] sm:$0xff]
      %v244 = vld [vmem:[%s219 + $0x80] sm:$0xff]
      %v245 = vld [vmem:[%s219 + $0x88] sm:$0x3]
      %v246 = vld [vmem:[%s219 + $0x90] sm:$0xff]
      %v247 = vld [vmem:[%s219 + $0x98] sm:$0xff]
      %v248 = vld [vmem:[%s219 + $0xa0] sm:$0x3]
      %v249 = vld [vmem:[%s219 + $0xa8] sm:$0xff]
      %v250 = vld [vmem:[%s219 + $0xb0] sm:$0xff]
      %v251 = vld [vmem:[%s219 + $0xb8] sm:$0x3]
      %v252 = vld [vmem:[%s219 + $0xc0] sm:$0xff]
      %v253 = vld [vmem:[%s219 + $0xc8] sm:$0xff]
      %v254 = vld [vmem:[%s219 + $0xd0] sm:$0x3]
      %v255 = vld [vmem:[%s219 + $0xd8] sm:$0xff]
      %v256 = vld [vmem:[%s219 + $0xe0] sm:$0xff]
      %v257 = vld [vmem:[%s219 + $0xe8] sm:$0x3]
      %v258 = vld [vmem:[%s219 + $0xf0] sm:$0xff]
      %v259 = vld [vmem:[%s219 + $0xf8] sm:$0xff]
      %v260 = vld [vmem:[%s219 + $0x100] sm:$0x3]
      %v261 = vld [vmem:[%s219 + $0x108] sm:$0xff]
      %v262 = vld [vmem:[%s219 + $0x110] sm:$0xff]
      %v263 = vld [vmem:[%s219 + $0x118] sm:$0x3]
      %v264 = vld [vmem:[%s219 + $0x120] sm:$0xff]
      %v265 = vld [vmem:[%s219 + $0x128] sm:$0xff]
      %v266 = vld [vmem:[%s219 + $0x130] sm:$0x3]
      %v267 = vld [vmem:[%s219 + $0x138] sm:$0xff]
      %v268 = vld [vmem:[%s219 + $0x140] sm:$0xff]
      %v269 = vld [vmem:[%s219 + $0x148] sm:$0x3]
      %v270 = vld [vmem:[%s219 + $0x150] sm:$0xff]
      %v271 = vld [vmem:[%s219 + $0x158] sm:$0xff]
      %v272 = vld [vmem:[%s219 + $0x160] sm:$0x3]
      %v273 = vld [vmem:[%s219 + $0x168] sm:$0xff]
      %v274 = vld [vmem:[%s219 + $0x170] sm:$0xff]
      %v275 = vld [vmem:[%s219 + $0x178] sm:$0x3]
      %v276 = vld [vmem:[%s219 + $0x180] sm:$0xff]
      %v277 = vld [vmem:[%s219 + $0x188] sm:$0xff]
      %v278 = vld [vmem:[%s219 + $0x190] sm:$0x3]
      %v279 = vld [vmem:[%s219 + $0x198] sm:$0xff]
      %v280 = vld [vmem:[%s219 + $0x1a0] sm:$0xff]
      %v281 = vld [vmem:[%s219 + $0x1a8] sm:$0x3]
      %v282 = vpack.c.bf16 %v228, %v228
      %v283 = vpack.c.bf16 %v229, %v229
      %v284 = vpack.c.bf16 %v230, %v230
      %v285 = vpack.c.bf16 %v231, %v231
      %v286 = vpack.c.bf16 %v232, %v232
      %v287 = vpack.c.bf16 %v233, %v233
      %v288 = vpack.c.bf16 %v234, %v234
      %v289 = vpack.c.bf16 %v235, %v235
      %v290 = vpack.c.bf16 %v236, %v236
      %v291 = vpack.c.bf16 %v237, %v237
      %v292 = vpack.c.bf16 %v238, %v238
      %v293 = vpack.c.bf16 %v239, %v239
      %v294 = vpack.c.bf16 %v240, %v240
      %v295 = vpack.c.bf16 %v241, %v241
      %v296 = vpack.c.bf16 %v242, %v242
      %v297 = vpack.c.bf16 %v243, %v243
      %v298 = vpack.c.bf16 %v244, %v244
      %v299 = vpack.c.bf16 %v245, %v245
      %v300 = vpack.c.bf16 %v246, %v246
      %v301 = vpack.c.bf16 %v247, %v247
      %v302 = vpack.c.bf16 %v248, %v248
      %v303 = vpack.c.bf16 %v249, %v249
      %v304 = vpack.c.bf16 %v250, %v250
      %v305 = vpack.c.bf16 %v251, %v251
      %v306 = vpack.c.bf16 %v252, %v252
      %v307 = vpack.c.bf16 %v253, %v253
      %v308 = vpack.c.bf16 %v254, %v254
      %v309 = vpack.c.bf16 %v255, %v255
      %v310 = vpack.c.bf16 %v256, %v256
      %v311 = vpack.c.bf16 %v257, %v257
      %v312 = vpack.c.bf16 %v258, %v258
      %v313 = vpack.c.bf16 %v259, %v259
      %v314 = vpack.c.bf16 %v260, %v260
      %v315 = vpack.c.bf16 %v261, %v261
      %v316 = vpack.c.bf16 %v262, %v262
      %v317 = vpack.c.bf16 %v263, %v263
      %v318 = vpack.c.bf16 %v264, %v264
      %v319 = vpack.c.bf16 %v265, %v265
      %v320 = vpack.c.bf16 %v266, %v266
      %v321 = vpack.c.bf16 %v267, %v267
      %v322 = vpack.c.bf16 %v268, %v268
      %v323 = vpack.c.bf16 %v269, %v269
      %v324 = vpack.c.bf16 %v270, %v270
      %v325 = vpack.c.bf16 %v271, %v271
      %v326 = vpack.c.bf16 %v272, %v272
      %v327 = vpack.c.bf16 %v273, %v273
      %v328 = vpack.c.bf16 %v274, %v274
      %v329 = vpack.c.bf16 %v275, %v275
      %v362 = vunpack.c.l.b16 %v282
      %v363 = vunpack.c.l.b16 %v283
      %v364 = vunpack.c.l.b16 %v285
      %v365 = vunpack.c.l.b16 %v286
      %v366 = vunpack.c.l.b16 %v288
      %v367 = vunpack.c.l.b16 %v289
      %v368 = vunpack.c.l.b16 %v291
      %v369 = vunpack.c.l.b16 %v292
      %v370 = vunpack.c.l.b16 %v294
      %v371 = vunpack.c.l.b16 %v295
      %v372 = vunpack.c.l.b16 %v297
      %v373 = vunpack.c.l.b16 %v298
      %v374 = vunpack.c.l.b16 %v300
      %v375 = vunpack.c.l.b16 %v301
      %v376 = vunpack.c.l.b16 %v303
      %v377 = vunpack.c.l.b16 %v304
      %v378 = vunpack.c.l.b16 %v306
      %v379 = vunpack.c.l.b16 %v307
      %v380 = vunpack.c.l.b16 %v309
      %v381 = vunpack.c.l.b16 %v310
      %v382 = vunpack.c.l.b16 %v312
      %v383 = vunpack.c.l.b16 %v313
      %v384 = vunpack.c.l.b16 %v315
      %v385 = vunpack.c.l.b16 %v316
      %v386 = vunpack.c.l.b16 %v318
      %v387 = vunpack.c.l.b16 %v319
      %v388 = vunpack.c.l.b16 %v321
      %v389 = vunpack.c.l.b16 %v322
      %v390 = vunpack.c.l.b16 %v324
      %v391 = vunpack.c.l.b16 %v325
      %v392 = vunpack.c.l.b16 %v327
      %v393 = vunpack.c.l.b16 %v328
      %v394 = vpack.c.b16 %v363, %v362
      %v395 = vpack.c.b16 %v365, %v364
      %v396 = vpack.c.b16 %v367, %v366
      %v397 = vpack.c.b16 %v369, %v368
      %v398 = vpack.c.b16 %v371, %v370
      %v399 = vpack.c.b16 %v373, %v372
      %v400 = vpack.c.b16 %v375, %v374
      %v401 = vpack.c.b16 %v377, %v376
      %v402 = vpack.c.b16 %v379, %v378
      %v403 = vpack.c.b16 %v381, %v380
      %v404 = vpack.c.b16 %v383, %v382
      %v405 = vpack.c.b16 %v385, %v384
      %v406 = vpack.c.b16 %v387, %v386
      %v407 = vpack.c.b16 %v389, %v388
      %v408 = vpack.c.b16 %v391, %v390
      %v409 = vpack.c.b16 %v393, %v392
      %v426 = vunpack.c.l.b16 %v284
      %v427 = vunpack.c.l.b16 %v287
      %v428 = vunpack.c.l.b16 %v290
      %v429 = vunpack.c.l.b16 %v293
      %v430 = vunpack.c.l.b16 %v296
      %v431 = vunpack.c.l.b16 %v299
      %v432 = vunpack.c.l.b16 %v302
      %v433 = vunpack.c.l.b16 %v305
      %v434 = vunpack.c.l.b16 %v308
      %v435 = vunpack.c.l.b16 %v311
      %v436 = vunpack.c.l.b16 %v314
      %v437 = vunpack.c.l.b16 %v317
      %v438 = vunpack.c.l.b16 %v320
      %v439 = vunpack.c.l.b16 %v323
      %v440 = vunpack.c.l.b16 %v326
      %v441 = vunpack.c.l.b16 %v329
      %v442 = vpack.c.b16 %v426, %v426
      %v443 = vpack.c.b16 %v427, %v427
      %v444 = vpack.c.b16 %v428, %v428
      %v445 = vpack.c.b16 %v429, %v429
      %v446 = vpack.c.b16 %v430, %v430
      %v447 = vpack.c.b16 %v431, %v431
      %v448 = vpack.c.b16 %v432, %v432
      %v449 = vpack.c.b16 %v433, %v433
      %v450 = vpack.c.b16 %v434, %v434
      %v451 = vpack.c.b16 %v435, %v435
      %v452 = vpack.c.b16 %v436, %v436
      %v453 = vpack.c.b16 %v437, %v437
      %v454 = vpack.c.b16 %v438, %v438
      %v455 = vpack.c.b16 %v439, %v439
      %v456 = vpack.c.b16 %v440, %v440
      %v457 = vpack.c.b16 %v441, %v441
      %vm458 = vsmask.f32 7424
      %v460 = vshrl.u32 %v394, 16
      %v462 = vshll.u32 %v394, 16
      %v464 = vrot.slane %v462, 1
      %v465 = vor.u32 %v460, %v464
      %v467 = vshll.u32 %v442, 16
      %v469 = vrot.slane %v467, 1
      %v470 = vsel %vm458, %v465, %v469
      %v472 = vshrl.u32 %v395, 16
      %v474 = vshll.u32 %v395, 16
      %v476 = vrot.slane %v474, 1
      %v477 = vor.u32 %v472, %v476
      %v479 = vshll.u32 %v443, 16
      %v481 = vrot.slane %v479, 1
      %v482 = vsel %vm458, %v477, %v481
      %v484 = vshrl.u32 %v396, 16
      %v486 = vshll.u32 %v396, 16
      %v488 = vrot.slane %v486, 1
      %v489 = vor.u32 %v484, %v488
      %v491 = vshll.u32 %v444, 16
      %v493 = vrot.slane %v491, 1
      %v494 = vsel %vm458, %v489, %v493
      %v496 = vshrl.u32 %v397, 16
      %v498 = vshll.u32 %v397, 16
      %v500 = vrot.slane %v498, 1
      %v501 = vor.u32 %v496, %v500
      %v503 = vshll.u32 %v445, 16
      %v505 = vrot.slane %v503, 1
      %v506 = vsel %vm458, %v501, %v505
      %v508 = vshrl.u32 %v398, 16
      %v510 = vshll.u32 %v398, 16
      %v512 = vrot.slane %v510, 1
      %v513 = vor.u32 %v508, %v512
      %v515 = vshll.u32 %v446, 16
      %v517 = vrot.slane %v515, 1
      %v518 = vsel %vm458, %v513, %v517
      %v520 = vshrl.u32 %v399, 16
      %v522 = vshll.u32 %v399, 16
      %v524 = vrot.slane %v522, 1
      %v525 = vor.u32 %v520, %v524
      %v527 = vshll.u32 %v447, 16
      %v529 = vrot.slane %v527, 1
      %v530 = vsel %vm458, %v525, %v529
      %v532 = vshrl.u32 %v400, 16
      %v534 = vshll.u32 %v400, 16
      %v536 = vrot.slane %v534, 1
      %v537 = vor.u32 %v532, %v536
      %v539 = vshll.u32 %v448, 16
      %v541 = vrot.slane %v539, 1
      %v542 = vsel %vm458, %v537, %v541
      %v544 = vshrl.u32 %v401, 16
      %v546 = vshll.u32 %v401, 16
      %v548 = vrot.slane %v546, 1
      %v549 = vor.u32 %v544, %v548
      %v551 = vshll.u32 %v449, 16
      %v553 = vrot.slane %v551, 1
      %v554 = vsel %vm458, %v549, %v553
      %v556 = vshrl.u32 %v402, 16
      %v558 = vshll.u32 %v402, 16
      %v560 = vrot.slane %v558, 1
      %v561 = vor.u32 %v556, %v560
      %v563 = vshll.u32 %v450, 16
      %v565 = vrot.slane %v563, 1
      %v566 = vsel %vm458, %v561, %v565
      %v568 = vshrl.u32 %v403, 16
      %v570 = vshll.u32 %v403, 16
      %v572 = vrot.slane %v570, 1
      %v573 = vor.u32 %v568, %v572
      %v575 = vshll.u32 %v451, 16
      %v577 = vrot.slane %v575, 1
      %v578 = vsel %vm458, %v573, %v577
      %v580 = vshrl.u32 %v404, 16
      %v582 = vshll.u32 %v404, 16
      %v584 = vrot.slane %v582, 1
      %v585 = vor.u32 %v580, %v584
      %v587 = vshll.u32 %v452, 16
      %v589 = vrot.slane %v587, 1
      %v590 = vsel %vm458, %v585, %v589
      %v592 = vshrl.u32 %v405, 16
      %v594 = vshll.u32 %v405, 16
      %v596 = vrot.slane %v594, 1
      %v597 = vor.u32 %v592, %v596
      %v599 = vshll.u32 %v453, 16
      %v601 = vrot.slane %v599, 1
      %v602 = vsel %vm458, %v597, %v601
      %v604 = vshrl.u32 %v406, 16
      %v606 = vshll.u32 %v406, 16
      %v608 = vrot.slane %v606, 1
      %v609 = vor.u32 %v604, %v608
      %v611 = vshll.u32 %v454, 16
      %v613 = vrot.slane %v611, 1
      %v614 = vsel %vm458, %v609, %v613
      %v616 = vshrl.u32 %v407, 16
      %v618 = vshll.u32 %v407, 16
      %v620 = vrot.slane %v618, 1
      %v621 = vor.u32 %v616, %v620
      %v623 = vshll.u32 %v455, 16
      %v625 = vrot.slane %v623, 1
      %v626 = vsel %vm458, %v621, %v625
      %v628 = vshrl.u32 %v408, 16
      %v630 = vshll.u32 %v408, 16
      %v632 = vrot.slane %v630, 1
      %v633 = vor.u32 %v628, %v632
      %v635 = vshll.u32 %v456, 16
      %v637 = vrot.slane %v635, 1
      %v638 = vsel %vm458, %v633, %v637
      %v640 = vshrl.u32 %v409, 16
      %v642 = vshll.u32 %v409, 16
      %v644 = vrot.slane %v642, 1
      %v645 = vor.u32 %v640, %v644
      %v647 = vshll.u32 %v457, 16
      %v649 = vrot.slane %v647, 1
      %v650 = vsel %vm458, %v645, %v649
      %651 = vrot.lane.b32.xlu0 %v470, 4
      %v652 = vpop.permute.xlu0 %651
      %653 = vrot.lane.b32.xlu0 %v482, 4
      %v654 = vpop.permute.xlu0 %653
      %655 = vrot.lane.b32.xlu0 %v494, 4
      %v656 = vpop.permute.xlu0 %655
      %657 = vrot.lane.b32.xlu0 %v506, 4
      %v658 = vpop.permute.xlu0 %657
      %659 = vrot.lane.b32.xlu0 %v518, 4
      %v660 = vpop.permute.xlu0 %659
      %661 = vrot.lane.b32.xlu0 %v530, 4
      %v662 = vpop.permute.xlu0 %661
      %663 = vrot.lane.b32.xlu0 %v542, 4
      %v664 = vpop.permute.xlu0 %663
      %665 = vrot.lane.b32.xlu0 %v554, 4
      %v666 = vpop.permute.xlu0 %665
      %667 = vrot.lane.b32.xlu0 %v566, 4
      %v668 = vpop.permute.xlu0 %667
      %669 = vrot.lane.b32.xlu0 %v578, 4
      %v670 = vpop.permute.xlu0 %669
      %671 = vrot.lane.b32.xlu0 %v590, 4
      %v672 = vpop.permute.xlu0 %671
      %673 = vrot.lane.b32.xlu0 %v602, 4
      %v674 = vpop.permute.xlu0 %673
      %675 = vrot.lane.b32.xlu0 %v614, 4
      %v676 = vpop.permute.xlu0 %675
      %677 = vrot.lane.b32.xlu0 %v626, 4
      %v678 = vpop.permute.xlu0 %677
      %679 = vrot.lane.b32.xlu0 %v638, 4
      %v680 = vpop.permute.xlu0 %679
      %681 = vrot.lane.b32.xlu0 %v650, 4
      %v682 = vpop.permute.xlu0 %681
      %vm683 = vcmask 1046528
      %v684 = vrot.slane %v394, 1
      %v685 = vrot.slane %v442, 1
      %v686 = vsel %vm683, %v684, %v685
      %v687 = vrot.slane %v395, 1
      %v688 = vrot.slane %v443, 1
      %v689 = vsel %vm683, %v687, %v688
      %v690 = vrot.slane %v396, 1
      %v691 = vrot.slane %v444, 1
      %v692 = vsel %vm683, %v690, %v691
      %v693 = vrot.slane %v397, 1
      %v694 = vrot.slane %v445, 1
      %v695 = vsel %vm683, %v693, %v694
      %v696 = vrot.slane %v398, 1
      %v697 = vrot.slane %v446, 1
      %v698 = vsel %vm683, %v696, %v697
      %v699 = vrot.slane %v399, 1
      %v700 = vrot.slane %v447, 1
      %v701 = vsel %vm683, %v699, %v700
      %v702 = vrot.slane %v400, 1
      %v703 = vrot.slane %v448, 1
      %v704 = vsel %vm683, %v702, %v703
      %v705 = vrot.slane %v401, 1
      %v706 = vrot.slane %v449, 1
      %v707 = vsel %vm683, %v705, %v706
      %v708 = vrot.slane %v402, 1
      %v709 = vrot.slane %v450, 1
      %v710 = vsel %vm683, %v708, %v709
      %v711 = vrot.slane %v403, 1
      %v712 = vrot.slane %v451, 1
      %v713 = vsel %vm683, %v711, %v712
      %v714 = vrot.slane %v404, 1
      %v715 = vrot.slane %v452, 1
      %v716 = vsel %vm683, %v714, %v715
      %v717 = vrot.slane %v405, 1
      %v718 = vrot.slane %v453, 1
      %v719 = vsel %vm683, %v717, %v718
      %v720 = vrot.slane %v406, 1
      %v721 = vrot.slane %v454, 1
      %v722 = vsel %vm683, %v720, %v721
      %v723 = vrot.slane %v407, 1
      %v724 = vrot.slane %v455, 1
      %v725 = vsel %vm683, %v723, %v724
      %v726 = vrot.slane %v408, 1
      %v727 = vrot.slane %v456, 1
      %v728 = vsel %vm683, %v726, %v727
      %v729 = vrot.slane %v409, 1
      %v730 = vrot.slane %v457, 1
      %v731 = vsel %vm683, %v729, %v730
      %732 = vrot.lane.b32.xlu0 %v686, 8
      %v733 = vpop.permute.xlu0 %732
      %734 = vrot.lane.b32.xlu0 %v689, 8
      %v735 = vpop.permute.xlu0 %734
      %736 = vrot.lane.b32.xlu0 %v692, 8
      %v737 = vpop.permute.xlu0 %736
      %738 = vrot.lane.b32.xlu0 %v695, 8
      %v739 = vpop.permute.xlu0 %738
      %740 = vrot.lane.b32.xlu0 %v698, 8
      %v741 = vpop.permute.xlu0 %740
      %742 = vrot.lane.b32.xlu0 %v701, 8
      %v743 = vpop.permute.xlu0 %742
      %744 = vrot.lane.b32.xlu0 %v704, 8
      %v745 = vpop.permute.xlu0 %744
      %746 = vrot.lane.b32.xlu0 %v707, 8
      %v747 = vpop.permute.xlu0 %746
      %748 = vrot.lane.b32.xlu0 %v710, 8
      %v749 = vpop.permute.xlu0 %748
      %750 = vrot.lane.b32.xlu0 %v713, 8
      %v751 = vpop.permute.xlu0 %750
      %752 = vrot.lane.b32.xlu0 %v716, 8
      %v753 = vpop.permute.xlu0 %752
      %754 = vrot.lane.b32.xlu0 %v719, 8
      %v755 = vpop.permute.xlu0 %754
      %756 = vrot.lane.b32.xlu0 %v722, 8
      %v757 = vpop.permute.xlu0 %756
      %758 = vrot.lane.b32.xlu0 %v725, 8
      %v759 = vpop.permute.xlu0 %758
      %760 = vrot.lane.b32.xlu0 %v728, 8
      %v761 = vpop.permute.xlu0 %760
      %762 = vrot.lane.b32.xlu0 %v731, 8
      %v763 = vpop.permute.xlu0 %762
      %vm764 = vcmask 31744
      %v766 = vsel %vm764, %v394, %v652
      %v768 = vsel %vm764, %v395, %v654
      %v770 = vsel %vm764, %v396, %v656
      %v772 = vsel %vm764, %v397, %v658
      %v774 = vsel %vm764, %v398, %v660
      %v776 = vsel %vm764, %v399, %v662
      %v778 = vsel %vm764, %v400, %v664
      %v780 = vsel %vm764, %v401, %v666
      %v782 = vsel %vm764, %v402, %v668
      %v784 = vsel %vm764, %v403, %v670
      %v786 = vsel %vm764, %v404, %v672
      %v788 = vsel %vm764, %v405, %v674
      %v790 = vsel %vm764, %v406, %v676
      %v792 = vsel %vm764, %v407, %v678
      %v794 = vsel %vm764, %v408, %v680
      %v796 = vsel %vm764, %v409, %v682
      %vm797 = vcmask 64512
      %v799 = vsel %vm797, %v766, %v733
      %v801 = vsel %vm797, %v768, %v735
      %v803 = vsel %vm797, %v770, %v737
      %v805 = vsel %vm797, %v772, %v739
      %v807 = vsel %vm797, %v774, %v741
      %v809 = vsel %vm797, %v776, %v743
      %v811 = vsel %vm797, %v778, %v745
      %v813 = vsel %vm797, %v780, %v747
      %v815 = vsel %vm797, %v782, %v749
      %v817 = vsel %vm797, %v784, %v751
      %v819 = vsel %vm797, %v786, %v753
      %v821 = vsel %vm797, %v788, %v755
      %v823 = vsel %vm797, %v790, %v757
      %v825 = vsel %vm797, %v792, %v759
      %v827 = vsel %vm797, %v794, %v761
      %v829 = vsel %vm797, %v796, %v763
      %v830 = vld [vmem:[%s1] sm:$0xf]
      %v831 = vld [vmem:[%s1 + $0x4] sm:$0x3]
      %v832 = vpack.c.bf16 %v276, %v276
      %v833 = vpack.c.bf16 %v277, %v277
      %v834 = vpack.c.bf16 %v278, %v278
      %v837 = vunpack.c.l.b16 %v832
      %v838 = vunpack.c.l.b16 %v833
      %v839 = vpack.c.b16 %v838, %v837
      %v841 = vunpack.c.l.b16 %v834
      %v842 = vpack.c.b16 %v841, %v841
      %v844 = vshrl.u32 %v839, 16
      %v846 = vshll.u32 %v839, 16
      %v848 = vrot.slane %v846, 1
      %v849 = vor.u32 %v844, %v848
      %v851 = vshll.u32 %v842, 16
      %v853 = vrot.slane %v851, 1
      %v854 = vsel %vm458, %v849, %v853
      %855 = vrot.lane.b32.xlu0 %v854, 4
      %v856 = vpop.permute.xlu0 %855
      %v857 = vrot.slane %v839, 1
      %v858 = vrot.slane %v842, 1
      %v859 = vsel %vm683, %v857, %v858
      %860 = vrot.lane.b32.xlu0 %v859, 8
      %v861 = vpop.permute.xlu0 %860
      %v863 = vsel %vm764, %v839, %v856
      %v865 = vsel %vm797, %v863, %v861
      %s866 = scalar_lea.vmem %s1, 8
      %v867 = vld [vmem:[%s866] sm:$0xf]
      %v868 = vld [vmem:[%s866 + $0x4] sm:$0x3]
      %v871 = vunpack.c.l.b16 %v867
      %v872 = vunpack.c.l.b16 %v868
      %v873 = vpack.c.b16 %v872, %v871
      %vm874 = vcmask 97280
      %v875 = vsel %vm874, %v801, 0
      %v877 = vsel %vm874, %v803, 0
      %v879 = vsel %vm874, %v805, 0
      %v881 = vsel %vm874, %v807, 0
      %v883 = vsel %vm874, %v809, 0
      %v885 = vsel %vm874, %v811, 0
      %v887 = vsel %vm874, %v813, 0
      %v889 = vsel %vm874, %v815, 0
      %v891 = vsel %vm874, %v817, 0
      %v893 = vsel %vm874, %v819, 0
      %v895 = vsel %vm874, %v821, 0
      %v897 = vsel %vm874, %v823, 0
      %v899 = vsel %vm874, %v825, 0
      %v901 = vsel %vm874, %v827, 0
      %v903 = vsel %vm874, %v829, 0
      %v905 = vsel %vm874, %v865, 0
      %vm907 = vcmask 1045504
      %v909 = vsel %vm907, %v873, 0
      %911 = vmatpush.bf16.msra.mxu0 0
      %912 = vmatpush.bf16.msra.mxu0 0
      %913 = vmatpush.bf16.msra.mxu0 0
      %914 = vmatpush.bf16.msra.mxu0 0
      %915 = vmatpush.bf16.msra.mxu0 0
      %916 = vmatpush.bf16.msra.mxu0 0
      %917 = vmatpush.bf16.msra.mxu0 0
      %918 = vmatpush.bf16.msra.mxu0 %v909
      %919 = vmatmul.bf16.gmra.mxu0 %v875
      %v920 = vpop.f32.mrf.mxu0
      %v921 = vadd.f32 0.0, %v920
      %v922 = vpop.f32.mrf.mxu0
      %v923 = vadd.f32 0.0, %v922
      %924 = vmatmul.bf16.gmra.mxu0 %v877
      %v925 = vpop.f32.mrf.mxu0
      %v926 = vadd.f32 0.0, %v925
      %v927 = vpop.f32.mrf.mxu0
      %v928 = vadd.f32 0.0, %v927
      %929 = vmatmul.bf16.gmra.mxu0 %v879
      %v930 = vpop.f32.mrf.mxu0
      %v931 = vadd.f32 0.0, %v930
      %v932 = vpop.f32.mrf.mxu0
      %v933 = vadd.f32 0.0, %v932
      %934 = vmatmul.bf16.gmra.mxu0 %v881
      %v935 = vpop.f32.mrf.mxu0
      %v936 = vadd.f32 0.0, %v935
      %v937 = vpop.f32.mrf.mxu0
      %v938 = vadd.f32 0.0, %v937
      %939 = vmatmul.bf16.gmra.mxu0 %v883
      %v940 = vpop.f32.mrf.mxu0
      %v941 = vadd.f32 0.0, %v940
      %v942 = vpop.f32.mrf.mxu0
      %v943 = vadd.f32 0.0, %v942
      %944 = vmatmul.bf16.gmra.mxu0 %v885
      %v945 = vpop.f32.mrf.mxu0
      %v946 = vadd.f32 0.0, %v945
      %v947 = vpop.f32.mrf.mxu0
      %v948 = vadd.f32 0.0, %v947
      %949 = vmatmul.bf16.gmra.mxu0 %v887
      %v950 = vpop.f32.mrf.mxu0
      %v951 = vadd.f32 0.0, %v950
      %v952 = vpop.f32.mrf.mxu0
      %v953 = vadd.f32 0.0, %v952
      %954 = vmatmul.bf16.gmra.mxu0 %v889
      %v955 = vpop.f32.mrf.mxu0
      %v956 = vadd.f32 0.0, %v955
      %v957 = vpop.f32.mrf.mxu0
      %v958 = vadd.f32 0.0, %v957
      %959 = vmatmul.bf16.gmra.mxu0 %v891
      %v960 = vpop.f32.mrf.mxu0
      %v961 = vadd.f32 0.0, %v960
      %v962 = vpop.f32.mrf.mxu0
      %v963 = vadd.f32 0.0, %v962
      %964 = vmatmul.bf16.gmra.mxu0 %v893
      %v965 = vpop.f32.mrf.mxu0
      %v966 = vadd.f32 0.0, %v965
      %v967 = vpop.f32.mrf.mxu0
      %v968 = vadd.f32 0.0, %v967
      %969 = vmatmul.bf16.gmra.mxu0 %v895
      %v970 = vpop.f32.mrf.mxu0
      %v971 = vadd.f32 0.0, %v970
      %v972 = vpop.f32.mrf.mxu0
      %v973 = vadd.f32 0.0, %v972
      %974 = vmatmul.bf16.gmra.mxu0 %v897
      %v975 = vpop.f32.mrf.mxu0
      %v976 = vadd.f32 0.0, %v975
      %v977 = vpop.f32.mrf.mxu0
      %v978 = vadd.f32 0.0, %v977
      %979 = vmatmul.bf16.gmra.mxu0 %v899
      %v980 = vpop.f32.mrf.mxu0
      %v981 = vadd.f32 0.0, %v980
      %v982 = vpop.f32.mrf.mxu0
      %v983 = vadd.f32 0.0, %v982
      %984 = vmatmul.bf16.gmra.mxu0 %v901
      %v985 = vpop.f32.mrf.mxu0
      %v986 = vadd.f32 0.0, %v985
      %v987 = vpop.f32.mrf.mxu0
      %v988 = vadd.f32 0.0, %v987
      %989 = vmatmul.bf16.gmra.mxu0 %v903
      %v990 = vpop.f32.mrf.mxu0
      %v991 = vadd.f32 0.0, %v990
      %v992 = vpop.f32.mrf.mxu0
      %v993 = vadd.f32 0.0, %v992
      %994 = vmatmul.bf16.gmra.mxu0 %v905
      %v995 = vpop.f32.mrf.mxu0
      %v996 = vadd.f32 0.0, %v995
      %v997 = vpop.f32.mrf.mxu0
      %v998 = vadd.f32 0.0, %v997
      %999 = vdwg.mxu0
      %v1002 = vunpack.c.l.b16 %v830
      %v1003 = vunpack.c.l.b16 %v831
      %v1004 = vpack.c.b16 %v1003, %v1002
      %v1005 = vsel %vm874, %v799, 0
      %v1008 = vsel %vm907, %v1004, 0
      %1010 = vmatpush.bf16.msra.mxu0 0
      %1011 = vmatpush.bf16.msra.mxu0 0
      %1012 = vmatpush.bf16.msra.mxu0 0
      %1013 = vmatpush.bf16.msra.mxu0 0
      %1014 = vmatpush.bf16.msra.mxu0 0
      %1015 = vmatpush.bf16.msra.mxu0 0
      %1016 = vmatpush.bf16.msra.mxu0 0
      %1017 = vmatpush.bf16.msra.mxu0 %v1008
      %1018 = vmatmul.bf16.gmra.mxu0 %v1005
      %v1019 = vpop.f32.mrf.mxu0
      %v1020 = vadd.f32 %v921, %v1019
      %v1021 = vpop.f32.mrf.mxu0
      %v1022 = vadd.f32 %v923, %v1021
      %1023 = vmatmul.bf16.gmra.mxu0 %v875
      %v1024 = vpop.f32.mrf.mxu0
      %v1025 = vadd.f32 %v926, %v1024
      %v1026 = vpop.f32.mrf.mxu0
      %v1027 = vadd.f32 %v928, %v1026
      %1028 = vmatmul.bf16.gmra.mxu0 %v877
      %v1029 = vpop.f32.mrf.mxu0
      %v1030 = vadd.f32 %v931, %v1029
      %v1031 = vpop.f32.mrf.mxu0
      %v1032 = vadd.f32 %v933, %v1031
      %1033 = vmatmul.bf16.gmra.mxu0 %v879
      %v1034 = vpop.f32.mrf.mxu0
      %v1035 = vadd.f32 %v936, %v1034
      %v1036 = vpop.f32.mrf.mxu0
      %v1037 = vadd.f32 %v938, %v1036
      %1038 = vmatmul.bf16.gmra.mxu0 %v881
      %v1039 = vpop.f32.mrf.mxu0
      %v1040 = vadd.f32 %v941, %v1039
      %v1041 = vpop.f32.mrf.mxu0
      %v1042 = vadd.f32 %v943, %v1041
      %1043 = vmatmul.bf16.gmra.mxu0 %v883
      %v1044 = vpop.f32.mrf.mxu0
      %v1045 = vadd.f32 %v946, %v1044
      %v1046 = vpop.f32.mrf.mxu0
      %v1047 = vadd.f32 %v948, %v1046
      %1048 = vmatmul.bf16.gmra.mxu0 %v885
      %v1049 = vpop.f32.mrf.mxu0
      %v1050 = vadd.f32 %v951, %v1049
      %v1051 = vpop.f32.mrf.mxu0
      %v1052 = vadd.f32 %v953, %v1051
      %1053 = vmatmul.bf16.gmra.mxu0 %v887
      %v1054 = vpop.f32.mrf.mxu0
      %v1055 = vadd.f32 %v956, %v1054
      %v1056 = vpop.f32.mrf.mxu0
      %v1057 = vadd.f32 %v958, %v1056
      %1058 = vmatmul.bf16.gmra.mxu0 %v889
      %v1059 = vpop.f32.mrf.mxu0
      %v1060 = vadd.f32 %v961, %v1059
      %v1061 = vpop.f32.mrf.mxu0
      %v1062 = vadd.f32 %v963, %v1061
      %1063 = vmatmul.bf16.gmra.mxu0 %v891
      %v1064 = vpop.f32.mrf.mxu0
      %v1065 = vadd.f32 %v966, %v1064
      %v1066 = vpop.f32.mrf.mxu0
      %v1067 = vadd.f32 %v968, %v1066
      %1068 = vmatmul.bf16.gmra.mxu0 %v893
      %v1069 = vpop.f32.mrf.mxu0
      %v1070 = vadd.f32 %v971, %v1069
      %v1071 = vpop.f32.mrf.mxu0
      %v1072 = vadd.f32 %v973, %v1071
      %1073 = vmatmul.bf16.gmra.mxu0 %v895
      %v1074 = vpop.f32.mrf.mxu0
      %v1075 = vadd.f32 %v976, %v1074
      %v1076 = vpop.f32.mrf.mxu0
      %v1077 = vadd.f32 %v978, %v1076
      %1078 = vmatmul.bf16.gmra.mxu0 %v897
      %v1079 = vpop.f32.mrf.mxu0
      %v1080 = vadd.f32 %v981, %v1079
      %v1081 = vpop.f32.mrf.mxu0
      %v1082 = vadd.f32 %v983, %v1081
      %1083 = vmatmul.bf16.gmra.mxu0 %v899
      %v1084 = vpop.f32.mrf.mxu0
      %v1085 = vadd.f32 %v986, %v1084
      %v1086 = vpop.f32.mrf.mxu0
      %v1087 = vadd.f32 %v988, %v1086
      %1088 = vmatmul.bf16.gmra.mxu0 %v901
      %v1089 = vpop.f32.mrf.mxu0
      %v1090 = vadd.f32 %v991, %v1089
      %v1091 = vpop.f32.mrf.mxu0
      %v1092 = vadd.f32 %v993, %v1091
      %1093 = vmatmul.bf16.gmra.mxu0 %v903
      %v1094 = vpop.f32.mrf.mxu0
      %v1095 = vadd.f32 %v996, %v1094
      %v1096 = vpop.f32.mrf.mxu0
      %v1097 = vadd.f32 %v998, %v1096
      %1098 = vdwg.mxu0
      %v1099 = vpack.c.bf16 %v279, %v279
      %v1100 = vpack.c.bf16 %v280, %v280
      %v1101 = vpack.c.bf16 %v281, %v281
      %v1104 = vunpack.c.l.b16 %v1099
      %v1105 = vunpack.c.l.b16 %v1100
      %v1106 = vpack.c.b16 %v1105, %v1104
      %v1108 = vunpack.c.l.b16 %v1101
      %v1109 = vpack.c.b16 %v1108, %v1108
      %v1111 = vshrl.u32 %v1106, 16
      %v1113 = vshll.u32 %v1106, 16
      %v1115 = vrot.slane %v1113, 1
      %v1116 = vor.u32 %v1111, %v1115
      %v1118 = vshll.u32 %v1109, 16
      %v1120 = vrot.slane %v1118, 1
      %v1121 = vsel %vm458, %v1116, %v1120
      %1122 = vrot.lane.b32.xlu0 %v1121, 4
      %v1123 = vpop.permute.xlu0 %1122
      %v1124 = vrot.slane %v1106, 1
      %v1125 = vrot.slane %v1109, 1
      %v1126 = vsel %vm683, %v1124, %v1125
      %1127 = vrot.lane.b32.xlu0 %v1126, 8
      %v1128 = vpop.permute.xlu0 %1127
      %v1130 = vsel %vm764, %v1106, %v1123
      %v1132 = vsel %vm797, %v1130, %v1128
      %s1133 = scalar_lea.vmem %s1, 16
      %v1134 = vld [vmem:[%s1133] sm:$0xf]
      %v1135 = vld [vmem:[%s1133 + $0x4] sm:$0x3]
      %v1138 = vunpack.c.l.b16 %v1134
      %v1139 = vunpack.c.l.b16 %v1135
      %v1140 = vpack.c.b16 %v1139, %v1138
      %v1141 = vsel %vm874, %v1132, 0
      %v1144 = vsel %vm907, %v1140, 0
      %1146 = vmatpush.bf16.msra.mxu0 0
      %1147 = vmatpush.bf16.msra.mxu0 0
      %1148 = vmatpush.bf16.msra.mxu0 0
      %1149 = vmatpush.bf16.msra.mxu0 0
      %1150 = vmatpush.bf16.msra.mxu0 0
      %1151 = vmatpush.bf16.msra.mxu0 0
      %1152 = vmatpush.bf16.msra.mxu0 0
      %1153 = vmatpush.bf16.msra.mxu0 %v1144
      %1154 = vmatmul.bf16.gmra.mxu0 %v877
      %v1155 = vpop.f32.mrf.mxu0
      %v1156 = vadd.f32 0.0, %v1155
      %v1157 = vpop.f32.mrf.mxu0
      %v1158 = vadd.f32 0.0, %v1157
      %1159 = vmatmul.bf16.gmra.mxu0 %v879
      %v1160 = vpop.f32.mrf.mxu0
      %v1161 = vadd.f32 0.0, %v1160
      %v1162 = vpop.f32.mrf.mxu0
      %v1163 = vadd.f32 0.0, %v1162
      %1164 = vmatmul.bf16.gmra.mxu0 %v881
      %v1165 = vpop.f32.mrf.mxu0
      %v1166 = vadd.f32 0.0, %v1165
      %v1167 = vpop.f32.mrf.mxu0
      %v1168 = vadd.f32 0.0, %v1167
      %1169 = vmatmul.bf16.gmra.mxu0 %v883
      %v1170 = vpop.f32.mrf.mxu0
      %v1171 = vadd.f32 0.0, %v1170
      %v1172 = vpop.f32.mrf.mxu0
      %v1173 = vadd.f32 0.0, %v1172
      %1174 = vmatmul.bf16.gmra.mxu0 %v885
      %v1175 = vpop.f32.mrf.mxu0
      %v1176 = vadd.f32 0.0, %v1175
      %v1177 = vpop.f32.mrf.mxu0
      %v1178 = vadd.f32 0.0, %v1177
      %1179 = vmatmul.bf16.gmra.mxu0 %v887
      %v1180 = vpop.f32.mrf.mxu0
      %v1181 = vadd.f32 0.0, %v1180
      %v1182 = vpop.f32.mrf.mxu0
      %v1183 = vadd.f32 0.0, %v1182
      %1184 = vmatmul.bf16.gmra.mxu0 %v889
      %v1185 = vpop.f32.mrf.mxu0
      %v1186 = vadd.f32 0.0, %v1185
      %v1187 = vpop.f32.mrf.mxu0
      %v1188 = vadd.f32 0.0, %v1187
      %1189 = vmatmul.bf16.gmra.mxu0 %v891
      %v1190 = vpop.f32.mrf.mxu0
      %v1191 = vadd.f32 0.0, %v1190
      %v1192 = vpop.f32.mrf.mxu0
      %v1193 = vadd.f32 0.0, %v1192
      %1194 = vmatmul.bf16.gmra.mxu0 %v893
      %v1195 = vpop.f32.mrf.mxu0
      %v1196 = vadd.f32 0.0, %v1195
      %v1197 = vpop.f32.mrf.mxu0
      %v1198 = vadd.f32 0.0, %v1197
      %1199 = vmatmul.bf16.gmra.mxu0 %v895
      %v1200 = vpop.f32.mrf.mxu0
      %v1201 = vadd.f32 0.0, %v1200
      %v1202 = vpop.f32.mrf.mxu0
      %v1203 = vadd.f32 0.0, %v1202
      %1204 = vmatmul.bf16.gmra.mxu0 %v897
      %v1205 = vpop.f32.mrf.mxu0
      %v1206 = vadd.f32 0.0, %v1205
      %v1207 = vpop.f32.mrf.mxu0
      %v1208 = vadd.f32 0.0, %v1207
      %1209 = vmatmul.bf16.gmra.mxu0 %v899
      %v1210 = vpop.f32.mrf.mxu0
      %v1211 = vadd.f32 0.0, %v1210
      %v1212 = vpop.f32.mrf.mxu0
      %v1213 = vadd.f32 0.0, %v1212
      %1214 = vmatmul.bf16.gmra.mxu0 %v901
      %v1215 = vpop.f32.mrf.mxu0
      %v1216 = vadd.f32 0.0, %v1215
      %v1217 = vpop.f32.mrf.mxu0
      %v1218 = vadd.f32 0.0, %v1217
      %1219 = vmatmul.bf16.gmra.mxu0 %v903
      %v1220 = vpop.f32.mrf.mxu0
      %v1221 = vadd.f32 0.0, %v1220
      %v1222 = vpop.f32.mrf.mxu0
      %v1223 = vadd.f32 0.0, %v1222
      %1224 = vmatmul.bf16.gmra.mxu0 %v905
      %v1225 = vpop.f32.mrf.mxu0
      %v1226 = vadd.f32 0.0, %v1225
      %v1227 = vpop.f32.mrf.mxu0
      %v1228 = vadd.f32 0.0, %v1227
      %1229 = vmatmul.bf16.gmra.mxu0 %v1141
      %v1230 = vpop.f32.mrf.mxu0
      %v1231 = vadd.f32 0.0, %v1230
      %v1232 = vpop.f32.mrf.mxu0
      %v1233 = vadd.f32 0.0, %v1232
      %1234 = vdwg.mxu0
      %v1235 = vadd.f32 %v1020, %v1156
      %v1236 = vadd.f32 %v1022, %v1158
      %v1237 = vadd.f32 %v1025, %v1161
      %v1238 = vadd.f32 %v1027, %v1163
      %v1239 = vadd.f32 %v1030, %v1166
      %v1240 = vadd.f32 %v1032, %v1168
      %v1241 = vadd.f32 %v1035, %v1171
      %v1242 = vadd.f32 %v1037, %v1173
      %v1243 = vadd.f32 %v1040, %v1176
      %v1244 = vadd.f32 %v1042, %v1178
      %v1245 = vadd.f32 %v1045, %v1181
      %v1246 = vadd.f32 %v1047, %v1183
      %v1247 = vadd.f32 %v1050, %v1186
      %v1248 = vadd.f32 %v1052, %v1188
      %v1249 = vadd.f32 %v1055, %v1191
      %v1250 = vadd.f32 %v1057, %v1193
      %v1251 = vadd.f32 %v1060, %v1196
      %v1252 = vadd.f32 %v1062, %v1198
      %v1253 = vadd.f32 %v1065, %v1201
      %v1254 = vadd.f32 %v1067, %v1203
      %v1255 = vadd.f32 %v1070, %v1206
      %v1256 = vadd.f32 %v1072, %v1208
      %v1257 = vadd.f32 %v1075, %v1211
      %v1258 = vadd.f32 %v1077, %v1213
      %v1259 = vadd.f32 %v1080, %v1216
      %v1260 = vadd.f32 %v1082, %v1218
      %v1261 = vadd.f32 %v1085, %v1221
      %v1262 = vadd.f32 %v1087, %v1223
      %v1263 = vadd.f32 %v1090, %v1226
      %v1264 = vadd.f32 %v1092, %v1228
      %v1265 = vadd.f32 %v1095, %v1231
      %v1266 = vadd.f32 %v1097, %v1233
      %v1268 = vperm.slane %v226, 0
      %v1270 = vmul.f32 %v1235, %v1268
      %v1271 = vmul.f32 %v1236, %v1268
      %v1272 = vmul.f32 %v1237, %v1268
      %v1273 = vmul.f32 %v1238, %v1268
      %v1274 = vmul.f32 %v1239, %v1268
      %v1275 = vmul.f32 %v1240, %v1268
      %v1276 = vmul.f32 %v1241, %v1268
      %v1277 = vmul.f32 %v1242, %v1268
      %v1278 = vmul.f32 %v1243, %v1268
      %v1279 = vmul.f32 %v1244, %v1268
      %v1280 = vmul.f32 %v1245, %v1268
      %v1281 = vmul.f32 %v1246, %v1268
      %v1282 = vmul.f32 %v1247, %v1268
      %v1283 = vmul.f32 %v1248, %v1268
      %v1284 = vmul.f32 %v1249, %v1268
      %v1285 = vmul.f32 %v1250, %v1268
      %v1286 = vmul.f32 %v1251, %v1268
      %v1287 = vmul.f32 %v1252, %v1268
      %v1288 = vmul.f32 %v1253, %v1268
      %v1289 = vmul.f32 %v1254, %v1268
      %v1290 = vmul.f32 %v1255, %v1268
      %v1291 = vmul.f32 %v1256, %v1268
      %v1292 = vmul.f32 %v1257, %v1268
      %v1293 = vmul.f32 %v1258, %v1268
      %v1294 = vmul.f32 %v1259, %v1268
      %v1295 = vmul.f32 %v1260, %v1268
      %v1296 = vmul.f32 %v1261, %v1268
      %v1297 = vmul.f32 %v1262, %v1268
      %v1298 = vmul.f32 %v1263, %v1268
      %v1299 = vmul.f32 %v1264, %v1268
      %v1300 = vmul.f32 %v1265, %v1268
      %v1301 = vmul.f32 %v1266, %v1268
      %v1303 = vperm.slane %v227, 0
      %v1305 = vadd.f32 %v1270, %v1303
      %v1306 = vadd.f32 %v1271, %v1303
      %v1307 = vadd.f32 %v1272, %v1303
      %v1308 = vadd.f32 %v1273, %v1303
      %v1309 = vadd.f32 %v1274, %v1303
      %v1310 = vadd.f32 %v1275, %v1303
      %v1311 = vadd.f32 %v1276, %v1303
      %v1312 = vadd.f32 %v1277, %v1303
      %v1313 = vadd.f32 %v1278, %v1303
      %v1314 = vadd.f32 %v1279, %v1303
      %v1315 = vadd.f32 %v1280, %v1303
      %v1316 = vadd.f32 %v1281, %v1303
      %v1317 = vadd.f32 %v1282, %v1303
      %v1318 = vadd.f32 %v1283, %v1303
      %v1319 = vadd.f32 %v1284, %v1303
      %v1320 = vadd.f32 %v1285, %v1303
      %v1321 = vadd.f32 %v1286, %v1303
      %v1322 = vadd.f32 %v1287, %v1303
      %v1323 = vadd.f32 %v1288, %v1303
      %v1324 = vadd.f32 %v1289, %v1303
      %v1325 = vadd.f32 %v1290, %v1303
      %v1326 = vadd.f32 %v1291, %v1303
      %v1327 = vadd.f32 %v1292, %v1303
      %v1328 = vadd.f32 %v1293, %v1303
      %v1329 = vadd.f32 %v1294, %v1303
      %v1330 = vadd.f32 %v1295, %v1303
      %v1331 = vadd.f32 %v1296, %v1303
      %v1332 = vadd.f32 %v1297, %v1303
      %v1333 = vadd.f32 %v1298, %v1303
      %v1334 = vadd.f32 %v1299, %v1303
      %v1335 = vadd.f32 %v1300, %v1303
      %v1336 = vadd.f32 %v1301, %v1303
      %v1337 = vmax.f32 %v1305, 0.0
      %v1338 = vmax.f32 %v1306, 0.0
      %v1339 = vmax.f32 %v1307, 0.0
      %v1340 = vmax.f32 %v1308, 0.0
      %v1341 = vmax.f32 %v1309, 0.0
      %v1342 = vmax.f32 %v1310, 0.0
      %v1343 = vmax.f32 %v1311, 0.0
      %v1344 = vmax.f32 %v1312, 0.0
      %v1345 = vmax.f32 %v1313, 0.0
      %v1346 = vmax.f32 %v1314, 0.0
      %v1347 = vmax.f32 %v1315, 0.0
      %v1348 = vmax.f32 %v1316, 0.0
      %v1349 = vmax.f32 %v1317, 0.0
      %v1350 = vmax.f32 %v1318, 0.0
      %v1351 = vmax.f32 %v1319, 0.0
      %v1352 = vmax.f32 %v1320, 0.0
      %v1353 = vmax.f32 %v1321, 0.0
      %v1354 = vmax.f32 %v1322, 0.0
      %v1355 = vmax.f32 %v1323, 0.0
      %v1356 = vmax.f32 %v1324, 0.0
      %v1357 = vmax.f32 %v1325, 0.0
      %v1358 = vmax.f32 %v1326, 0.0
      %v1359 = vmax.f32 %v1327, 0.0
      %v1360 = vmax.f32 %v1328, 0.0
      %v1361 = vmax.f32 %v1329, 0.0
      %v1362 = vmax.f32 %v1330, 0.0
      %v1363 = vmax.f32 %v1331, 0.0
      %v1364 = vmax.f32 %v1332, 0.0
      %v1365 = vmax.f32 %v1333, 0.0
      %v1366 = vmax.f32 %v1334, 0.0
      %v1367 = vmax.f32 %v1335, 0.0
      %v1368 = vmax.f32 %v1336, 0.0
      %v1369 = vpack.c.bf16 %v1337, %v1337
      %v1370 = vpack.c.bf16 %v1338, %v1338
      %v1371 = vpack.c.bf16 %v1339, %v1339
      %v1372 = vpack.c.bf16 %v1340, %v1340
      %v1373 = vpack.c.bf16 %v1341, %v1341
      %v1374 = vpack.c.bf16 %v1342, %v1342
      %v1375 = vpack.c.bf16 %v1343, %v1343
      %v1376 = vpack.c.bf16 %v1344, %v1344
      %v1377 = vpack.c.bf16 %v1345, %v1345
      %v1378 = vpack.c.bf16 %v1346, %v1346
      %v1379 = vpack.c.bf16 %v1347, %v1347
      %v1380 = vpack.c.bf16 %v1348, %v1348
      %v1381 = vpack.c.bf16 %v1349, %v1349
      %v1382 = vpack.c.bf16 %v1350, %v1350
      %v1383 = vpack.c.bf16 %v1351, %v1351
      %v1384 = vpack.c.bf16 %v1352, %v1352
      %v1385 = vpack.c.bf16 %v1353, %v1353
      %v1386 = vpack.c.bf16 %v1354, %v1354
      %v1387 = vpack.c.bf16 %v1355, %v1355
      %v1388 = vpack.c.bf16 %v1356, %v1356
      %v1389 = vpack.c.bf16 %v1357, %v1357
      %v1390 = vpack.c.bf16 %v1358, %v1358
      %v1391 = vpack.c.bf16 %v1359, %v1359
      %v1392 = vpack.c.bf16 %v1360, %v1360
      %v1393 = vpack.c.bf16 %v1361, %v1361
      %v1394 = vpack.c.bf16 %v1362, %v1362
      %v1395 = vpack.c.bf16 %v1363, %v1363
      %v1396 = vpack.c.bf16 %v1364, %v1364
      %v1397 = vpack.c.bf16 %v1365, %v1365
      %v1398 = vpack.c.bf16 %v1366, %v1366
      %v1399 = vpack.c.bf16 %v1367, %v1367
      %v1400 = vpack.c.bf16 %v1368, %v1368
      %v1433 = vunpack.c.l.b16 %v1369
      %v1434 = vunpack.c.l.b16 %v1370
      %v1435 = vunpack.c.l.b16 %v1371
      %v1436 = vunpack.c.l.b16 %v1372
      %v1437 = vunpack.c.l.b16 %v1373
      %v1438 = vunpack.c.l.b16 %v1374
      %v1439 = vunpack.c.l.b16 %v1375
      %v1440 = vunpack.c.l.b16 %v1376
      %v1441 = vunpack.c.l.b16 %v1377
      %v1442 = vunpack.c.l.b16 %v1378
      %v1443 = vunpack.c.l.b16 %v1379
      %v1444 = vunpack.c.l.b16 %v1380
      %v1445 = vunpack.c.l.b16 %v1381
      %v1446 = vunpack.c.l.b16 %v1382
      %v1447 = vunpack.c.l.b16 %v1383
      %v1448 = vunpack.c.l.b16 %v1384
      %v1449 = vunpack.c.l.b16 %v1385
      %v1450 = vunpack.c.l.b16 %v1386
      %v1451 = vunpack.c.l.b16 %v1387
      %v1452 = vunpack.c.l.b16 %v1388
      %v1453 = vunpack.c.l.b16 %v1389
      %v1454 = vunpack.c.l.b16 %v1390
      %v1455 = vunpack.c.l.b16 %v1391
      %v1456 = vunpack.c.l.b16 %v1392
      %v1457 = vunpack.c.l.b16 %v1393
      %v1458 = vunpack.c.l.b16 %v1394
      %v1459 = vunpack.c.l.b16 %v1395
      %v1460 = vunpack.c.l.b16 %v1396
      %v1461 = vunpack.c.l.b16 %v1397
      %v1462 = vunpack.c.l.b16 %v1398
      %v1463 = vunpack.c.l.b16 %v1399
      %v1464 = vunpack.c.l.b16 %v1400
      %v1465 = vpack.c.b16 %v1434, %v1433
      %v1466 = vpack.c.b16 %v1436, %v1435
      %v1467 = vpack.c.b16 %v1438, %v1437
      %v1468 = vpack.c.b16 %v1440, %v1439
      %v1469 = vpack.c.b16 %v1442, %v1441
      %v1470 = vpack.c.b16 %v1444, %v1443
      %v1471 = vpack.c.b16 %v1446, %v1445
      %v1472 = vpack.c.b16 %v1448, %v1447
      %v1473 = vpack.c.b16 %v1450, %v1449
      %v1474 = vpack.c.b16 %v1452, %v1451
      %v1475 = vpack.c.b16 %v1454, %v1453
      %v1476 = vpack.c.b16 %v1456, %v1455
      %v1477 = vpack.c.b16 %v1458, %v1457
      %v1478 = vpack.c.b16 %v1460, %v1459
      %v1479 = vpack.c.b16 %v1462, %v1461
      %v1480 = vpack.c.b16 %v1464, %v1463
      %v1482 = vshrl.u32 %v1465, 16
      %v1484 = vrot.slane %v1482, 7
      %v1485 = vshll.u32 %v1465, 16
      %v1487 = vor.u32 %v1484, %v1485
      %v1489 = vshrl.u32 %v1466, 16
      %v1491 = vrot.slane %v1489, 7
      %v1492 = vshll.u32 %v1466, 16
      %v1494 = vor.u32 %v1491, %v1492
      %v1496 = vshrl.u32 %v1467, 16
      %v1498 = vrot.slane %v1496, 7
      %v1499 = vshll.u32 %v1467, 16
      %v1501 = vor.u32 %v1498, %v1499
      %v1503 = vshrl.u32 %v1468, 16
      %v1505 = vrot.slane %v1503, 7
      %v1506 = vshll.u32 %v1468, 16
      %v1508 = vor.u32 %v1505, %v1506
      %v1510 = vshrl.u32 %v1469, 16
      %v1512 = vrot.slane %v1510, 7
      %v1513 = vshll.u32 %v1469, 16
      %v1515 = vor.u32 %v1512, %v1513
      %v1517 = vshrl.u32 %v1470, 16
      %v1519 = vrot.slane %v1517, 7
      %v1520 = vshll.u32 %v1470, 16
      %v1522 = vor.u32 %v1519, %v1520
      %v1524 = vshrl.u32 %v1471, 16
      %v1526 = vrot.slane %v1524, 7
      %v1527 = vshll.u32 %v1471, 16
      %v1529 = vor.u32 %v1526, %v1527
      %v1531 = vshrl.u32 %v1472, 16
      %v1533 = vrot.slane %v1531, 7
      %v1534 = vshll.u32 %v1472, 16
      %v1536 = vor.u32 %v1533, %v1534
      %v1538 = vshrl.u32 %v1473, 16
      %v1540 = vrot.slane %v1538, 7
      %v1541 = vshll.u32 %v1473, 16
      %v1543 = vor.u32 %v1540, %v1541
      %v1545 = vshrl.u32 %v1474, 16
      %v1547 = vrot.slane %v1545, 7
      %v1548 = vshll.u32 %v1474, 16
      %v1550 = vor.u32 %v1547, %v1548
      %v1552 = vshrl.u32 %v1475, 16
      %v1554 = vrot.slane %v1552, 7
      %v1555 = vshll.u32 %v1475, 16
      %v1557 = vor.u32 %v1554, %v1555
      %v1559 = vshrl.u32 %v1476, 16
      %v1561 = vrot.slane %v1559, 7
      %v1562 = vshll.u32 %v1476, 16
      %v1564 = vor.u32 %v1561, %v1562
      %v1566 = vshrl.u32 %v1477, 16
      %v1568 = vrot.slane %v1566, 7
      %v1569 = vshll.u32 %v1477, 16
      %v1571 = vor.u32 %v1568, %v1569
      %v1573 = vshrl.u32 %v1478, 16
      %v1575 = vrot.slane %v1573, 7
      %v1576 = vshll.u32 %v1478, 16
      %v1578 = vor.u32 %v1575, %v1576
      %v1580 = vshrl.u32 %v1479, 16
      %v1582 = vrot.slane %v1580, 7
      %v1583 = vshll.u32 %v1479, 16
      %v1585 = vor.u32 %v1582, %v1583
      %v1587 = vshrl.u32 %v1480, 16
      %v1589 = vrot.slane %v1587, 7
      %v1590 = vshll.u32 %v1480, 16
      %v1592 = vor.u32 %v1589, %v1590
      %vm1625 = vcmask 1040384
      %vm1626 = vsmask.f32 256
      %vm1627 = vmand %vm1625, %vm1626
      %v1628 = vsel %vm1627, 0, %v1487
      %v1629 = vsel %vm1627, 0, %v1494
      %v1630 = vsel %vm1627, 0, %v1501
      %v1631 = vsel %vm1627, 0, %v1508
      %v1632 = vsel %vm1627, 0, %v1515
      %v1633 = vsel %vm1627, 0, %v1522
      %v1634 = vsel %vm1627, 0, %v1529
      %v1635 = vsel %vm1627, 0, %v1536
      %v1636 = vsel %vm1627, 0, %v1543
      %v1637 = vsel %vm1627, 0, %v1550
      %v1638 = vsel %vm1627, 0, %v1557
      %v1639 = vsel %vm1627, 0, %v1564
      %v1640 = vsel %vm1627, 0, %v1571
      %v1641 = vsel %vm1627, 0, %v1578
      %v1642 = vsel %vm1627, 0, %v1585
      %v1643 = vsel %vm1627, 0, %v1592
      %v1644 = vsel %vm1627, %v1484, 0
      %v1645 = vsel %vm1627, %v1491, 0
      %v1646 = vsel %vm1627, %v1498, 0
      %v1647 = vsel %vm1627, %v1505, 0
      %v1648 = vsel %vm1627, %v1512, 0
      %v1649 = vsel %vm1627, %v1519, 0
      %v1650 = vsel %vm1627, %v1526, 0
      %v1651 = vsel %vm1627, %v1533, 0
      %v1652 = vsel %vm1627, %v1540, 0
      %v1653 = vsel %vm1627, %v1547, 0
      %v1654 = vsel %vm1627, %v1554, 0
      %v1655 = vsel %vm1627, %v1561, 0
      %v1656 = vsel %vm1627, %v1568, 0
      %v1657 = vsel %vm1627, %v1575, 0
      %v1658 = vsel %vm1627, %v1582, 0
      %v1659 = vsel %vm1627, %v1589, 0
      %v1661 = vshrl.u32 0, 16
      %v1663 = vshll.u32 0, 16
      %v1665 = vrot.slane %v1663, 1
      %v1666 = vor.u32 %v1661, %v1665
      %v1667 = vsel %vm458, %v1666, %v1665
      %v1669 = vshrl.u32 %v1628, 16
      %v1671 = vshll.u32 %v1628, 16
      %v1673 = vrot.slane %v1671, 1
      %v1674 = vor.u32 %v1669, %v1673
      %v1676 = vshll.u32 %v1644, 16
      %v1678 = vrot.slane %v1676, 1
      %v1679 = vsel %vm458, %v1674, %v1678
      %v1681 = vshrl.u32 %v1629, 16
      %v1683 = vshll.u32 %v1629, 16
      %v1685 = vrot.slane %v1683, 1
      %v1686 = vor.u32 %v1681, %v1685
      %v1688 = vshll.u32 %v1645, 16
      %v1690 = vrot.slane %v1688, 1
      %v1691 = vsel %vm458, %v1686, %v1690
      %v1693 = vshrl.u32 %v1630, 16
      %v1695 = vshll.u32 %v1630, 16
      %v1697 = vrot.slane %v1695, 1
      %v1698 = vor.u32 %v1693, %v1697
      %v1700 = vshll.u32 %v1646, 16
      %v1702 = vrot.slane %v1700, 1
      %v1703 = vsel %vm458, %v1698, %v1702
      %v1705 = vshrl.u32 %v1631, 16
      %v1707 = vshll.u32 %v1631, 16
      %v1709 = vrot.slane %v1707, 1
      %v1710 = vor.u32 %v1705, %v1709
      %v1712 = vshll.u32 %v1647, 16
      %v1714 = vrot.slane %v1712, 1
      %v1715 = vsel %vm458, %v1710, %v1714
      %v1717 = vshrl.u32 %v1632, 16
      %v1719 = vshll.u32 %v1632, 16
      %v1721 = vrot.slane %v1719, 1
      %v1722 = vor.u32 %v1717, %v1721
      %v1724 = vshll.u32 %v1648, 16
      %v1726 = vrot.slane %v1724, 1
      %v1727 = vsel %vm458, %v1722, %v1726
      %v1729 = vshrl.u32 %v1633, 16
      %v1731 = vshll.u32 %v1633, 16
      %v1733 = vrot.slane %v1731, 1
      %v1734 = vor.u32 %v1729, %v1733
      %v1736 = vshll.u32 %v1649, 16
      %v1738 = vrot.slane %v1736, 1
      %v1739 = vsel %vm458, %v1734, %v1738
      %v1741 = vshrl.u32 %v1634, 16
      %v1743 = vshll.u32 %v1634, 16
      %v1745 = vrot.slane %v1743, 1
      %v1746 = vor.u32 %v1741, %v1745
      %v1748 = vshll.u32 %v1650, 16
      %v1750 = vrot.slane %v1748, 1
      %v1751 = vsel %vm458, %v1746, %v1750
      %v1753 = vshrl.u32 %v1635, 16
      %v1755 = vshll.u32 %v1635, 16
      %v1757 = vrot.slane %v1755, 1
      %v1758 = vor.u32 %v1753, %v1757
      %v1760 = vshll.u32 %v1651, 16
      %v1762 = vrot.slane %v1760, 1
      %v1763 = vsel %vm458, %v1758, %v1762
      %v1765 = vshrl.u32 %v1636, 16
      %v1767 = vshll.u32 %v1636, 16
      %v1769 = vrot.slane %v1767, 1
      %v1770 = vor.u32 %v1765, %v1769
      %v1772 = vshll.u32 %v1652, 16
      %v1774 = vrot.slane %v1772, 1
      %v1775 = vsel %vm458, %v1770, %v1774
      %v1777 = vshrl.u32 %v1637, 16
      %v1779 = vshll.u32 %v1637, 16
      %v1781 = vrot.slane %v1779, 1
      %v1782 = vor.u32 %v1777, %v1781
      %v1784 = vshll.u32 %v1653, 16
      %v1786 = vrot.slane %v1784, 1
      %v1787 = vsel %vm458, %v1782, %v1786
      %v1789 = vshrl.u32 %v1638, 16
      %v1791 = vshll.u32 %v1638, 16
      %v1793 = vrot.slane %v1791, 1
      %v1794 = vor.u32 %v1789, %v1793
      %v1796 = vshll.u32 %v1654, 16
      %v1798 = vrot.slane %v1796, 1
      %v1799 = vsel %vm458, %v1794, %v1798
      %v1801 = vshrl.u32 %v1639, 16
      %v1803 = vshll.u32 %v1639, 16
      %v1805 = vrot.slane %v1803, 1
      %v1806 = vor.u32 %v1801, %v1805
      %v1808 = vshll.u32 %v1655, 16
      %v1810 = vrot.slane %v1808, 1
      %v1811 = vsel %vm458, %v1806, %v1810
      %v1813 = vshrl.u32 %v1640, 16
      %v1815 = vshll.u32 %v1640, 16
      %v1817 = vrot.slane %v1815, 1
      %v1818 = vor.u32 %v1813, %v1817
      %v1820 = vshll.u32 %v1656, 16
      %v1822 = vrot.slane %v1820, 1
      %v1823 = vsel %vm458, %v1818, %v1822
      %v1825 = vshrl.u32 %v1641, 16
      %v1827 = vshll.u32 %v1641, 16
      %v1829 = vrot.slane %v1827, 1
      %v1830 = vor.u32 %v1825, %v1829
      %v1832 = vshll.u32 %v1657, 16
      %v1834 = vrot.slane %v1832, 1
      %v1835 = vsel %vm458, %v1830, %v1834
      %v1837 = vshrl.u32 %v1642, 16
      %v1839 = vshll.u32 %v1642, 16
      %v1841 = vrot.slane %v1839, 1
      %v1842 = vor.u32 %v1837, %v1841
      %v1844 = vshll.u32 %v1658, 16
      %v1846 = vrot.slane %v1844, 1
      %v1847 = vsel %vm458, %v1842, %v1846
      %1848 = vrot.lane.b32.xlu0 %v1667, 4
      %v1849 = vpop.permute.xlu0 %1848
      %1850 = vrot.lane.b32.xlu0 %v1679, 4
      %v1851 = vpop.permute.xlu0 %1850
      %1852 = vrot.lane.b32.xlu0 %v1691, 4
      %v1853 = vpop.permute.xlu0 %1852
      %1854 = vrot.lane.b32.xlu0 %v1703, 4
      %v1855 = vpop.permute.xlu0 %1854
      %1856 = vrot.lane.b32.xlu0 %v1715, 4
      %v1857 = vpop.permute.xlu0 %1856
      %1858 = vrot.lane.b32.xlu0 %v1727, 4
      %v1859 = vpop.permute.xlu0 %1858
      %1860 = vrot.lane.b32.xlu0 %v1739, 4
      %v1861 = vpop.permute.xlu0 %1860
      %1862 = vrot.lane.b32.xlu0 %v1751, 4
      %v1863 = vpop.permute.xlu0 %1862
      %1864 = vrot.lane.b32.xlu0 %v1763, 4
      %v1865 = vpop.permute.xlu0 %1864
      %1866 = vrot.lane.b32.xlu0 %v1775, 4
      %v1867 = vpop.permute.xlu0 %1866
      %1868 = vrot.lane.b32.xlu0 %v1787, 4
      %v1869 = vpop.permute.xlu0 %1868
      %1870 = vrot.lane.b32.xlu0 %v1799, 4
      %v1871 = vpop.permute.xlu0 %1870
      %1872 = vrot.lane.b32.xlu0 %v1811, 4
      %v1873 = vpop.permute.xlu0 %1872
      %1874 = vrot.lane.b32.xlu0 %v1823, 4
      %v1875 = vpop.permute.xlu0 %1874
      %1876 = vrot.lane.b32.xlu0 %v1835, 4
      %v1877 = vpop.permute.xlu0 %1876
      %1878 = vrot.lane.b32.xlu0 %v1847, 4
      %v1879 = vpop.permute.xlu0 %1878
      %v1911 = vrot.slane 0, 1
      %v1912 = vsel %vm683, %v1911, %v1911
      %v1913 = vrot.slane %v1628, 1
      %v1914 = vrot.slane %v1644, 1
      %v1915 = vsel %vm683, %v1913, %v1914
      %v1916 = vrot.slane %v1629, 1
      %v1917 = vrot.slane %v1645, 1
      %v1918 = vsel %vm683, %v1916, %v1917
      %v1919 = vrot.slane %v1630, 1
      %v1920 = vrot.slane %v1646, 1
      %v1921 = vsel %vm683, %v1919, %v1920
      %v1922 = vrot.slane %v1631, 1
      %v1923 = vrot.slane %v1647, 1
      %v1924 = vsel %vm683, %v1922, %v1923
      %v1925 = vrot.slane %v1632, 1
      %v1926 = vrot.slane %v1648, 1
      %v1927 = vsel %vm683, %v1925, %v1926
      %v1928 = vrot.slane %v1633, 1
      %v1929 = vrot.slane %v1649, 1
      %v1930 = vsel %vm683, %v1928, %v1929
      %v1931 = vrot.slane %v1634, 1
      %v1932 = vrot.slane %v1650, 1
      %v1933 = vsel %vm683, %v1931, %v1932
      %v1934 = vrot.slane %v1635, 1
      %v1935 = vrot.slane %v1651, 1
      %v1936 = vsel %vm683, %v1934, %v1935
      %v1937 = vrot.slane %v1636, 1
      %v1938 = vrot.slane %v1652, 1
      %v1939 = vsel %vm683, %v1937, %v1938
      %v1940 = vrot.slane %v1637, 1
      %v1941 = vrot.slane %v1653, 1
      %v1942 = vsel %vm683, %v1940, %v1941
      %v1943 = vrot.slane %v1638, 1
      %v1944 = vrot.slane %v1654, 1
      %v1945 = vsel %vm683, %v1943, %v1944
      %v1946 = vrot.slane %v1639, 1
      %v1947 = vrot.slane %v1655, 1
      %v1948 = vsel %vm683, %v1946, %v1947
      %v1949 = vrot.slane %v1640, 1
      %v1950 = vrot.slane %v1656, 1
      %v1951 = vsel %vm683, %v1949, %v1950
      %v1952 = vrot.slane %v1641, 1
      %v1953 = vrot.slane %v1657, 1
      %v1954 = vsel %vm683, %v1952, %v1953
      %v1955 = vrot.slane %v1642, 1
      %v1956 = vrot.slane %v1658, 1
      %v1957 = vsel %vm683, %v1955, %v1956
      %1958 = vrot.lane.b32.xlu0 %v1912, 8
      %v1959 = vpop.permute.xlu0 %1958
      %1960 = vrot.lane.b32.xlu0 %v1915, 8
      %v1961 = vpop.permute.xlu0 %1960
      %1962 = vrot.lane.b32.xlu0 %v1918, 8
      %v1963 = vpop.permute.xlu0 %1962
      %1964 = vrot.lane.b32.xlu0 %v1921, 8
      %v1965 = vpop.permute.xlu0 %1964
      %1966 = vrot.lane.b32.xlu0 %v1924, 8
      %v1967 = vpop.permute.xlu0 %1966
      %1968 = vrot.lane.b32.xlu0 %v1927, 8
      %v1969 = vpop.permute.xlu0 %1968
      %1970 = vrot.lane.b32.xlu0 %v1930, 8
      %v1971 = vpop.permute.xlu0 %1970
      %1972 = vrot.lane.b32.xlu0 %v1933, 8
      %v1973 = vpop.permute.xlu0 %1972
      %1974 = vrot.lane.b32.xlu0 %v1936, 8
      %v1975 = vpop.permute.xlu0 %1974
      %1976 = vrot.lane.b32.xlu0 %v1939, 8
      %v1977 = vpop.permute.xlu0 %1976
      %1978 = vrot.lane.b32.xlu0 %v1942, 8
      %v1979 = vpop.permute.xlu0 %1978
      %1980 = vrot.lane.b32.xlu0 %v1945, 8
      %v1981 = vpop.permute.xlu0 %1980
      %1982 = vrot.lane.b32.xlu0 %v1948, 8
      %v1983 = vpop.permute.xlu0 %1982
      %1984 = vrot.lane.b32.xlu0 %v1951, 8
      %v1985 = vpop.permute.xlu0 %1984
      %1986 = vrot.lane.b32.xlu0 %v1954, 8
      %v1987 = vpop.permute.xlu0 %1986
      %1988 = vrot.lane.b32.xlu0 %v1957, 8
      %v1989 = vpop.permute.xlu0 %1988
      %v1991 = vsel %vm764, 0, %v1849
      %v1993 = vsel %vm764, %v1628, %v1851
      %v1995 = vsel %vm764, %v1629, %v1853
      %v1997 = vsel %vm764, %v1630, %v1855
      %v1999 = vsel %vm764, %v1631, %v1857
      %v2001 = vsel %vm764, %v1632, %v1859
      %v2003 = vsel %vm764, %v1633, %v1861
      %v2005 = vsel %vm764, %v1634, %v1863
      %v2007 = vsel %vm764, %v1635, %v1865
      %v2009 = vsel %vm764, %v1636, %v1867
      %v2011 = vsel %vm764, %v1637, %v1869
      %v2013 = vsel %vm764, %v1638, %v1871
      %v2015 = vsel %vm764, %v1639, %v1873
      %v2017 = vsel %vm764, %v1640, %v1875
      %v2019 = vsel %vm764, %v1641, %v1877
      %v2021 = vsel %vm764, %v1642, %v1879
      %v2023 = vsel %vm797, %v1991, %v1959
      %v2025 = vsel %vm797, %v1993, %v1961
      %v2027 = vsel %vm797, %v1995, %v1963
      %v2029 = vsel %vm797, %v1997, %v1965
      %v2031 = vsel %vm797, %v1999, %v1967
      %v2033 = vsel %vm797, %v2001, %v1969
      %v2035 = vsel %vm797, %v2003, %v1971
      %v2037 = vsel %vm797, %v2005, %v1973
      %v2039 = vsel %vm797, %v2007, %v1975
      %v2041 = vsel %vm797, %v2009, %v1977
      %v2043 = vsel %vm797, %v2011, %v1979
      %v2045 = vsel %vm797, %v2013, %v1981
      %v2047 = vsel %vm797, %v2015, %v1983
      %v2049 = vsel %vm797, %v2017, %v1985
      %v2051 = vsel %vm797, %v2019, %v1987
      %v2053 = vsel %vm797, %v2021, %v1989
      %v2054 = vld [vmem:[%s2] sm:$0xf]
      %v2055 = vld [vmem:[%s2 + $0x4] sm:$0x3]
      %v2057 = vshrl.u32 %v1643, 16
      %v2059 = vshll.u32 %v1643, 16
      %v2061 = vrot.slane %v2059, 1
      %v2062 = vor.u32 %v2057, %v2061
      %v2064 = vshll.u32 %v1659, 16
      %v2066 = vrot.slane %v2064, 1
      %v2067 = vsel %vm458, %v2062, %v2066
      %2068 = vrot.lane.b32.xlu0 %v2067, 4
      %v2069 = vpop.permute.xlu0 %2068
      %v2072 = vrot.slane %v1643, 1
      %v2073 = vrot.slane %v1659, 1
      %v2074 = vsel %vm683, %v2072, %v2073
      %2075 = vrot.lane.b32.xlu0 %v2074, 8
      %v2076 = vpop.permute.xlu0 %2075
      %v2078 = vsel %vm764, %v1643, %v2069
      %v2080 = vsel %vm797, %v2078, %v2076
      %s2081 = scalar_lea.vmem %s2, 8
      %v2082 = vld [vmem:[%s2081] sm:$0xf]
      %v2083 = vld [vmem:[%s2081 + $0x4] sm:$0x3]
      %v2086 = vunpack.c.l.b16 %v2082
      %v2087 = vunpack.c.l.b16 %v2083
      %v2088 = vpack.c.b16 %v2087, %v2086
      %v2089 = vsel %vm874, %v2025, 0
      %v2091 = vsel %vm874, %v2027, 0
      %v2093 = vsel %vm874, %v2029, 0
      %v2095 = vsel %vm874, %v2031, 0
      %v2097 = vsel %vm874, %v2033, 0
      %v2099 = vsel %vm874, %v2035, 0
      %v2101 = vsel %vm874, %v2037, 0
      %v2103 = vsel %vm874, %v2039, 0
      %v2105 = vsel %vm874, %v2041, 0
      %v2107 = vsel %vm874, %v2043, 0
      %v2109 = vsel %vm874, %v2045, 0
      %v2111 = vsel %vm874, %v2047, 0
      %v2113 = vsel %vm874, %v2049, 0
      %v2115 = vsel %vm874, %v2051, 0
      %v2117 = vsel %vm874, %v2053, 0
      %v2119 = vsel %vm874, %v2080, 0
      %v2122 = vsel %vm907, %v2088, 0
      %2124 = vmatpush.bf16.msra.mxu0 0
      %2125 = vmatpush.bf16.msra.mxu0 0
      %2126 = vmatpush.bf16.msra.mxu0 0
      %2127 = vmatpush.bf16.msra.mxu0 0
      %2128 = vmatpush.bf16.msra.mxu0 0
      %2129 = vmatpush.bf16.msra.mxu0 0
      %2130 = vmatpush.bf16.msra.mxu0 0
      %2131 = vmatpush.bf16.msra.mxu0 %v2122
      %2132 = vmatmul.bf16.gmra.mxu0 %v2089
      %v2133 = vpop.f32.mrf.mxu0
      %v2134 = vadd.f32 0.0, %v2133
      %v2135 = vpop.f32.mrf.mxu0
      %v2136 = vadd.f32 0.0, %v2135
      %2137 = vmatmul.bf16.gmra.mxu0 %v2091
      %v2138 = vpop.f32.mrf.mxu0
      %v2139 = vadd.f32 0.0, %v2138
      %v2140 = vpop.f32.mrf.mxu0
      %v2141 = vadd.f32 0.0, %v2140
      %2142 = vmatmul.bf16.gmra.mxu0 %v2093
      %v2143 = vpop.f32.mrf.mxu0
      %v2144 = vadd.f32 0.0, %v2143
      %v2145 = vpop.f32.mrf.mxu0
      %v2146 = vadd.f32 0.0, %v2145
      %2147 = vmatmul.bf16.gmra.mxu0 %v2095
      %v2148 = vpop.f32.mrf.mxu0
      %v2149 = vadd.f32 0.0, %v2148
      %v2150 = vpop.f32.mrf.mxu0
      %v2151 = vadd.f32 0.0, %v2150
      %2152 = vmatmul.bf16.gmra.mxu0 %v2097
      %v2153 = vpop.f32.mrf.mxu0
      %v2154 = vadd.f32 0.0, %v2153
      %v2155 = vpop.f32.mrf.mxu0
      %v2156 = vadd.f32 0.0, %v2155
      %2157 = vmatmul.bf16.gmra.mxu0 %v2099
      %v2158 = vpop.f32.mrf.mxu0
      %v2159 = vadd.f32 0.0, %v2158
      %v2160 = vpop.f32.mrf.mxu0
      %v2161 = vadd.f32 0.0, %v2160
      %2162 = vmatmul.bf16.gmra.mxu0 %v2101
      %v2163 = vpop.f32.mrf.mxu0
      %v2164 = vadd.f32 0.0, %v2163
      %v2165 = vpop.f32.mrf.mxu0
      %v2166 = vadd.f32 0.0, %v2165
      %2167 = vmatmul.bf16.gmra.mxu0 %v2103
      %v2168 = vpop.f32.mrf.mxu0
      %v2169 = vadd.f32 0.0, %v2168
      %v2170 = vpop.f32.mrf.mxu0
      %v2171 = vadd.f32 0.0, %v2170
      %2172 = vmatmul.bf16.gmra.mxu0 %v2105
      %v2173 = vpop.f32.mrf.mxu0
      %v2174 = vadd.f32 0.0, %v2173
      %v2175 = vpop.f32.mrf.mxu0
      %v2176 = vadd.f32 0.0, %v2175
      %2177 = vmatmul.bf16.gmra.mxu0 %v2107
      %v2178 = vpop.f32.mrf.mxu0
      %v2179 = vadd.f32 0.0, %v2178
      %v2180 = vpop.f32.mrf.mxu0
      %v2181 = vadd.f32 0.0, %v2180
      %2182 = vmatmul.bf16.gmra.mxu0 %v2109
      %v2183 = vpop.f32.mrf.mxu0
      %v2184 = vadd.f32 0.0, %v2183
      %v2185 = vpop.f32.mrf.mxu0
      %v2186 = vadd.f32 0.0, %v2185
      %2187 = vmatmul.bf16.gmra.mxu0 %v2111
      %v2188 = vpop.f32.mrf.mxu0
      %v2189 = vadd.f32 0.0, %v2188
      %v2190 = vpop.f32.mrf.mxu0
      %v2191 = vadd.f32 0.0, %v2190
      %2192 = vmatmul.bf16.gmra.mxu0 %v2113
      %v2193 = vpop.f32.mrf.mxu0
      %v2194 = vadd.f32 0.0, %v2193
      %v2195 = vpop.f32.mrf.mxu0
      %v2196 = vadd.f32 0.0, %v2195
      %2197 = vmatmul.bf16.gmra.mxu0 %v2115
      %v2198 = vpop.f32.mrf.mxu0
      %v2199 = vadd.f32 0.0, %v2198
      %v2200 = vpop.f32.mrf.mxu0
      %v2201 = vadd.f32 0.0, %v2200
      %2202 = vmatmul.bf16.gmra.mxu0 %v2117
      %v2203 = vpop.f32.mrf.mxu0
      %v2204 = vadd.f32 0.0, %v2203
      %v2205 = vpop.f32.mrf.mxu0
      %v2206 = vadd.f32 0.0, %v2205
      %2207 = vmatmul.bf16.gmra.mxu0 %v2119
      %v2208 = vpop.f32.mrf.mxu0
      %v2209 = vadd.f32 0.0, %v2208
      %v2210 = vpop.f32.mrf.mxu0
      %v2211 = vadd.f32 0.0, %v2210
      %2212 = vdwg.mxu0
      %v2215 = vunpack.c.l.b16 %v2054
      %v2216 = vunpack.c.l.b16 %v2055
      %v2217 = vpack.c.b16 %v2216, %v2215
      %v2218 = vsel %vm874, %v2023, 0
      %v2221 = vsel %vm907, %v2217, 0
      %2223 = vmatpush.bf16.msra.mxu0 0
      %2224 = vmatpush.bf16.msra.mxu0 0
      %2225 = vmatpush.bf16.msra.mxu0 0
      %2226 = vmatpush.bf16.msra.mxu0 0
      %2227 = vmatpush.bf16.msra.mxu0 0
      %2228 = vmatpush.bf16.msra.mxu0 0
      %2229 = vmatpush.bf16.msra.mxu0 0
      %2230 = vmatpush.bf16.msra.mxu0 %v2221
      %2231 = vmatmul.bf16.gmra.mxu0 %v2218
      %v2232 = vpop.f32.mrf.mxu0
      %v2233 = vadd.f32 %v2134, %v2232
      %v2234 = vpop.f32.mrf.mxu0
      %v2235 = vadd.f32 %v2136, %v2234
      %2236 = vmatmul.bf16.gmra.mxu0 %v2089
      %v2237 = vpop.f32.mrf.mxu0
      %v2238 = vadd.f32 %v2139, %v2237
      %v2239 = vpop.f32.mrf.mxu0
      %v2240 = vadd.f32 %v2141, %v2239
      %2241 = vmatmul.bf16.gmra.mxu0 %v2091
      %v2242 = vpop.f32.mrf.mxu0
      %v2243 = vadd.f32 %v2144, %v2242
      %v2244 = vpop.f32.mrf.mxu0
      %v2245 = vadd.f32 %v2146, %v2244
      %2246 = vmatmul.bf16.gmra.mxu0 %v2093
      %v2247 = vpop.f32.mrf.mxu0
      %v2248 = vadd.f32 %v2149, %v2247
      %v2249 = vpop.f32.mrf.mxu0
      %v2250 = vadd.f32 %v2151, %v2249
      %2251 = vmatmul.bf16.gmra.mxu0 %v2095
      %v2252 = vpop.f32.mrf.mxu0
      %v2253 = vadd.f32 %v2154, %v2252
      %v2254 = vpop.f32.mrf.mxu0
      %v2255 = vadd.f32 %v2156, %v2254
      %2256 = vmatmul.bf16.gmra.mxu0 %v2097
      %v2257 = vpop.f32.mrf.mxu0
      %v2258 = vadd.f32 %v2159, %v2257
      %v2259 = vpop.f32.mrf.mxu0
      %v2260 = vadd.f32 %v2161, %v2259
      %2261 = vmatmul.bf16.gmra.mxu0 %v2099
      %v2262 = vpop.f32.mrf.mxu0
      %v2263 = vadd.f32 %v2164, %v2262
      %v2264 = vpop.f32.mrf.mxu0
      %v2265 = vadd.f32 %v2166, %v2264
      %2266 = vmatmul.bf16.gmra.mxu0 %v2101
      %v2267 = vpop.f32.mrf.mxu0
      %v2268 = vadd.f32 %v2169, %v2267
      %v2269 = vpop.f32.mrf.mxu0
      %v2270 = vadd.f32 %v2171, %v2269
      %2271 = vmatmul.bf16.gmra.mxu0 %v2103
      %v2272 = vpop.f32.mrf.mxu0
      %v2273 = vadd.f32 %v2174, %v2272
      %v2274 = vpop.f32.mrf.mxu0
      %v2275 = vadd.f32 %v2176, %v2274
      %2276 = vmatmul.bf16.gmra.mxu0 %v2105
      %v2277 = vpop.f32.mrf.mxu0
      %v2278 = vadd.f32 %v2179, %v2277
      %v2279 = vpop.f32.mrf.mxu0
      %v2280 = vadd.f32 %v2181, %v2279
      %2281 = vmatmul.bf16.gmra.mxu0 %v2107
      %v2282 = vpop.f32.mrf.mxu0
      %v2283 = vadd.f32 %v2184, %v2282
      %v2284 = vpop.f32.mrf.mxu0
      %v2285 = vadd.f32 %v2186, %v2284
      %2286 = vmatmul.bf16.gmra.mxu0 %v2109
      %v2287 = vpop.f32.mrf.mxu0
      %v2288 = vadd.f32 %v2189, %v2287
      %v2289 = vpop.f32.mrf.mxu0
      %v2290 = vadd.f32 %v2191, %v2289
      %2291 = vmatmul.bf16.gmra.mxu0 %v2111
      %v2292 = vpop.f32.mrf.mxu0
      %v2293 = vadd.f32 %v2194, %v2292
      %v2294 = vpop.f32.mrf.mxu0
      %v2295 = vadd.f32 %v2196, %v2294
      %2296 = vmatmul.bf16.gmra.mxu0 %v2113
      %v2297 = vpop.f32.mrf.mxu0
      %v2298 = vadd.f32 %v2199, %v2297
      %v2299 = vpop.f32.mrf.mxu0
      %v2300 = vadd.f32 %v2201, %v2299
      %2301 = vmatmul.bf16.gmra.mxu0 %v2115
      %v2302 = vpop.f32.mrf.mxu0
      %v2303 = vadd.f32 %v2204, %v2302
      %v2304 = vpop.f32.mrf.mxu0
      %v2305 = vadd.f32 %v2206, %v2304
      %2306 = vmatmul.bf16.gmra.mxu0 %v2117
      %v2307 = vpop.f32.mrf.mxu0
      %v2308 = vadd.f32 %v2209, %v2307
      %v2309 = vpop.f32.mrf.mxu0
      %v2310 = vadd.f32 %v2211, %v2309
      %2311 = vdwg.mxu0
      %s2312 = scalar_lea.vmem %s2, 16
      %v2313 = vld [vmem:[%s2312] sm:$0xf]
      %v2314 = vld [vmem:[%s2312 + $0x4] sm:$0x3]
      %v2317 = vunpack.c.l.b16 %v2313
      %v2318 = vunpack.c.l.b16 %v2314
      %v2319 = vpack.c.b16 %v2318, %v2317
      %v2321 = vsel %vm907, %v2319, 0
      %2323 = vmatpush.bf16.msra.mxu0 0
      %2324 = vmatpush.bf16.msra.mxu0 0
      %2325 = vmatpush.bf16.msra.mxu0 0
      %2326 = vmatpush.bf16.msra.mxu0 0
      %2327 = vmatpush.bf16.msra.mxu0 0
      %2328 = vmatpush.bf16.msra.mxu0 0
      %2329 = vmatpush.bf16.msra.mxu0 0
      %2330 = vmatpush.bf16.msra.mxu0 %v2321
      %2331 = vmatmul.bf16.gmra.mxu0 %v2091
      %v2332 = vpop.f32.mrf.mxu0
      %v2333 = vadd.f32 0.0, %v2332
      %v2334 = vpop.f32.mrf.mxu0
      %v2335 = vadd.f32 0.0, %v2334
      %2336 = vmatmul.bf16.gmra.mxu0 %v2093
      %v2337 = vpop.f32.mrf.mxu0
      %v2338 = vadd.f32 0.0, %v2337
      %v2339 = vpop.f32.mrf.mxu0
      %v2340 = vadd.f32 0.0, %v2339
      %2341 = vmatmul.bf16.gmra.mxu0 %v2095
      %v2342 = vpop.f32.mrf.mxu0
      %v2343 = vadd.f32 0.0, %v2342
      %v2344 = vpop.f32.mrf.mxu0
      %v2345 = vadd.f32 0.0, %v2344
      %2346 = vmatmul.bf16.gmra.mxu0 %v2097
      %v2347 = vpop.f32.mrf.mxu0
      %v2348 = vadd.f32 0.0, %v2347
      %v2349 = vpop.f32.mrf.mxu0
      %v2350 = vadd.f32 0.0, %v2349
      %2351 = vmatmul.bf16.gmra.mxu0 %v2099
      %v2352 = vpop.f32.mrf.mxu0
      %v2353 = vadd.f32 0.0, %v2352
      %v2354 = vpop.f32.mrf.mxu0
      %v2355 = vadd.f32 0.0, %v2354
      %2356 = vmatmul.bf16.gmra.mxu0 %v2101
      %v2357 = vpop.f32.mrf.mxu0
      %v2358 = vadd.f32 0.0, %v2357
      %v2359 = vpop.f32.mrf.mxu0
      %v2360 = vadd.f32 0.0, %v2359
      %2361 = vmatmul.bf16.gmra.mxu0 %v2103
      %v2362 = vpop.f32.mrf.mxu0
      %v2363 = vadd.f32 0.0, %v2362
      %v2364 = vpop.f32.mrf.mxu0
      %v2365 = vadd.f32 0.0, %v2364
      %2366 = vmatmul.bf16.gmra.mxu0 %v2105
      %v2367 = vpop.f32.mrf.mxu0
      %v2368 = vadd.f32 0.0, %v2367
      %v2369 = vpop.f32.mrf.mxu0
      %v2370 = vadd.f32 0.0, %v2369
      %2371 = vmatmul.bf16.gmra.mxu0 %v2107
      %v2372 = vpop.f32.mrf.mxu0
      %v2373 = vadd.f32 0.0, %v2372
      %v2374 = vpop.f32.mrf.mxu0
      %v2375 = vadd.f32 0.0, %v2374
      %2376 = vmatmul.bf16.gmra.mxu0 %v2109
      %v2377 = vpop.f32.mrf.mxu0
      %v2378 = vadd.f32 0.0, %v2377
      %v2379 = vpop.f32.mrf.mxu0
      %v2380 = vadd.f32 0.0, %v2379
      %2381 = vmatmul.bf16.gmra.mxu0 %v2111
      %v2382 = vpop.f32.mrf.mxu0
      %v2383 = vadd.f32 0.0, %v2382
      %v2384 = vpop.f32.mrf.mxu0
      %v2385 = vadd.f32 0.0, %v2384
      %2386 = vmatmul.bf16.gmra.mxu0 %v2113
      %v2387 = vpop.f32.mrf.mxu0
      %v2388 = vadd.f32 0.0, %v2387
      %v2389 = vpop.f32.mrf.mxu0
      %v2390 = vadd.f32 0.0, %v2389
      %2391 = vmatmul.bf16.gmra.mxu0 %v2115
      %v2392 = vpop.f32.mrf.mxu0
      %v2393 = vadd.f32 0.0, %v2392
      %v2394 = vpop.f32.mrf.mxu0
      %v2395 = vadd.f32 0.0, %v2394
      %2396 = vmatmul.bf16.gmra.mxu0 %v2117
      %v2397 = vpop.f32.mrf.mxu0
      %v2398 = vadd.f32 0.0, %v2397
      %v2399 = vpop.f32.mrf.mxu0
      %v2400 = vadd.f32 0.0, %v2399
      %2401 = vmatmul.bf16.gmra.mxu0 %v2119
      %v2402 = vpop.f32.mrf.mxu0
      %v2403 = vadd.f32 0.0, %v2402
      %v2404 = vpop.f32.mrf.mxu0
      %v2405 = vadd.f32 0.0, %v2404
      %2406 = vmatmul.bf16.gmra.mxu0 %v2218
      %v2407 = vpop.f32.mrf.mxu0
      %v2408 = vadd.f32 0.0, %v2407
      %v2409 = vpop.f32.mrf.mxu0
      %v2410 = vadd.f32 0.0, %v2409
      %2411 = vdwg.mxu0
      %v2412 = vadd.f32 %v2233, %v2333
      %v2413 = vadd.f32 %v2235, %v2335
      %v2414 = vadd.f32 %v2238, %v2338
      %v2415 = vadd.f32 %v2240, %v2340
      %v2416 = vadd.f32 %v2243, %v2343
      %v2417 = vadd.f32 %v2245, %v2345
      %v2418 = vadd.f32 %v2248, %v2348
      %v2419 = vadd.f32 %v2250, %v2350
      %v2420 = vadd.f32 %v2253, %v2353
      %v2421 = vadd.f32 %v2255, %v2355
      %v2422 = vadd.f32 %v2258, %v2358
      %v2423 = vadd.f32 %v2260, %v2360
      %v2424 = vadd.f32 %v2263, %v2363
      %v2425 = vadd.f32 %v2265, %v2365
      %v2426 = vadd.f32 %v2268, %v2368
      %v2427 = vadd.f32 %v2270, %v2370
      %v2428 = vadd.f32 %v2273, %v2373
      %v2429 = vadd.f32 %v2275, %v2375
      %v2430 = vadd.f32 %v2278, %v2378
      %v2431 = vadd.f32 %v2280, %v2380
      %v2432 = vadd.f32 %v2283, %v2383
      %v2433 = vadd.f32 %v2285, %v2385
      %v2434 = vadd.f32 %v2288, %v2388
      %v2435 = vadd.f32 %v2290, %v2390
      %v2436 = vadd.f32 %v2293, %v2393
      %v2437 = vadd.f32 %v2295, %v2395
      %v2438 = vadd.f32 %v2298, %v2398
      %v2439 = vadd.f32 %v2300, %v2400
      %v2440 = vadd.f32 %v2303, %v2403
      %v2441 = vadd.f32 %v2305, %v2405
      %v2442 = vadd.f32 %v2308, %v2408
      %v2443 = vadd.f32 %v2310, %v2410
      %v2444 = vmul.f32 %v2412, %v1268
      %v2445 = vmul.f32 %v2413, %v1268
      %v2446 = vmul.f32 %v2414, %v1268
      %v2447 = vmul.f32 %v2415, %v1268
      %v2448 = vmul.f32 %v2416, %v1268
      %v2449 = vmul.f32 %v2417, %v1268
      %v2450 = vmul.f32 %v2418, %v1268
      %v2451 = vmul.f32 %v2419, %v1268
      %v2452 = vmul.f32 %v2420, %v1268
      %v2453 = vmul.f32 %v2421, %v1268
      %v2454 = vmul.f32 %v2422, %v1268
      %v2455 = vmul.f32 %v2423, %v1268
      %v2456 = vmul.f32 %v2424, %v1268
      %v2457 = vmul.f32 %v2425, %v1268
      %v2458 = vmul.f32 %v2426, %v1268
      %v2459 = vmul.f32 %v2427, %v1268
      %v2460 = vmul.f32 %v2428, %v1268
      %v2461 = vmul.f32 %v2429, %v1268
      %v2462 = vmul.f32 %v2430, %v1268
      %v2463 = vmul.f32 %v2431, %v1268
      %v2464 = vmul.f32 %v2432, %v1268
      %v2465 = vmul.f32 %v2433, %v1268
      %v2466 = vmul.f32 %v2434, %v1268
      %v2467 = vmul.f32 %v2435, %v1268
      %v2468 = vmul.f32 %v2436, %v1268
      %v2469 = vmul.f32 %v2437, %v1268
      %v2470 = vmul.f32 %v2438, %v1268
      %v2471 = vmul.f32 %v2439, %v1268
      %v2472 = vmul.f32 %v2440, %v1268
      %v2473 = vmul.f32 %v2441, %v1268
      %v2474 = vmul.f32 %v2442, %v1268
      %v2475 = vmul.f32 %v2443, %v1268
      %v2476 = vadd.f32 %v2444, %v1303
      %v2477 = vadd.f32 %v2445, %v1303
      %v2478 = vadd.f32 %v2446, %v1303
      %v2479 = vadd.f32 %v2447, %v1303
      %v2480 = vadd.f32 %v2448, %v1303
      %v2481 = vadd.f32 %v2449, %v1303
      %v2482 = vadd.f32 %v2450, %v1303
      %v2483 = vadd.f32 %v2451, %v1303
      %v2484 = vadd.f32 %v2452, %v1303
      %v2485 = vadd.f32 %v2453, %v1303
      %v2486 = vadd.f32 %v2454, %v1303
      %v2487 = vadd.f32 %v2455, %v1303
      %v2488 = vadd.f32 %v2456, %v1303
      %v2489 = vadd.f32 %v2457, %v1303
      %v2490 = vadd.f32 %v2458, %v1303
      %v2491 = vadd.f32 %v2459, %v1303
      %v2492 = vadd.f32 %v2460, %v1303
      %v2493 = vadd.f32 %v2461, %v1303
      %v2494 = vadd.f32 %v2462, %v1303
      %v2495 = vadd.f32 %v2463, %v1303
      %v2496 = vadd.f32 %v2464, %v1303
      %v2497 = vadd.f32 %v2465, %v1303
      %v2498 = vadd.f32 %v2466, %v1303
      %v2499 = vadd.f32 %v2467, %v1303
      %v2500 = vadd.f32 %v2468, %v1303
      %v2501 = vadd.f32 %v2469, %v1303
      %v2502 = vadd.f32 %v2470, %v1303
      %v2503 = vadd.f32 %v2471, %v1303
      %v2504 = vadd.f32 %v2472, %v1303
      %v2505 = vadd.f32 %v2473, %v1303
      %v2506 = vadd.f32 %v2474, %v1303
      %v2507 = vadd.f32 %v2475, %v1303
      %vm2556 = vcmask 1046528
      %v2557 = vrot.slane %v231, 1
      %v2558 = vrot.slane %v232, 1
      %v2559 = vsel %vm2556, %v2557, %v2558
      %v2560 = vrot.slane %v233, 1
      %v2561 = vsel %vm2556, %v2558, %v2560
      %v2562 = vrot.slane %v234, 1
      %v2563 = vrot.slane %v235, 1
      %v2564 = vsel %vm2556, %v2562, %v2563
      %v2565 = vrot.slane %v236, 1
      %v2566 = vsel %vm2556, %v2563, %v2565
      %v2567 = vrot.slane %v237, 1
      %v2568 = vrot.slane %v238, 1
      %v2569 = vsel %vm2556, %v2567, %v2568
      %v2570 = vrot.slane %v239, 1
      %v2571 = vsel %vm2556, %v2568, %v2570
      %v2572 = vrot.slane %v240, 1
      %v2573 = vrot.slane %v241, 1
      %v2574 = vsel %vm2556, %v2572, %v2573
      %v2575 = vrot.slane %v242, 1
      %v2576 = vsel %vm2556, %v2573, %v2575
      %v2577 = vrot.slane %v243, 1
      %v2578 = vrot.slane %v244, 1
      %v2579 = vsel %vm2556, %v2577, %v2578
      %v2580 = vrot.slane %v245, 1
      %v2581 = vsel %vm2556, %v2578, %v2580
      %v2582 = vrot.slane %v246, 1
      %v2583 = vrot.slane %v247, 1
      %v2584 = vsel %vm2556, %v2582, %v2583
      %v2585 = vrot.slane %v248, 1
      %v2586 = vsel %vm2556, %v2583, %v2585
      %v2587 = vrot.slane %v249, 1
      %v2588 = vrot.slane %v250, 1
      %v2589 = vsel %vm2556, %v2587, %v2588
      %v2590 = vrot.slane %v251, 1
      %v2591 = vsel %vm2556, %v2588, %v2590
      %v2592 = vrot.slane %v252, 1
      %v2593 = vrot.slane %v253, 1
      %v2594 = vsel %vm2556, %v2592, %v2593
      %v2595 = vrot.slane %v254, 1
      %v2596 = vsel %vm2556, %v2593, %v2595
      %v2597 = vrot.slane %v255, 1
      %v2598 = vrot.slane %v256, 1
      %v2599 = vsel %vm2556, %v2597, %v2598
      %v2600 = vrot.slane %v257, 1
      %v2601 = vsel %vm2556, %v2598, %v2600
      %v2602 = vrot.slane %v258, 1
      %v2603 = vrot.slane %v259, 1
      %v2604 = vsel %vm2556, %v2602, %v2603
      %v2605 = vrot.slane %v260, 1
      %v2606 = vsel %vm2556, %v2603, %v2605
      %v2607 = vrot.slane %v261, 1
      %v2608 = vrot.slane %v262, 1
      %v2609 = vsel %vm2556, %v2607, %v2608
      %v2610 = vrot.slane %v263, 1
      %v2611 = vsel %vm2556, %v2608, %v2610
      %v2612 = vrot.slane %v264, 1
      %v2613 = vrot.slane %v265, 1
      %v2614 = vsel %vm2556, %v2612, %v2613
      %v2615 = vrot.slane %v266, 1
      %v2616 = vsel %vm2556, %v2613, %v2615
      %v2617 = vrot.slane %v267, 1
      %v2618 = vrot.slane %v268, 1
      %v2619 = vsel %vm2556, %v2617, %v2618
      %v2620 = vrot.slane %v269, 1
      %v2621 = vsel %vm2556, %v2618, %v2620
      %v2622 = vrot.slane %v270, 1
      %v2623 = vrot.slane %v271, 1
      %v2624 = vsel %vm2556, %v2622, %v2623
      %v2625 = vrot.slane %v272, 1
      %v2626 = vsel %vm2556, %v2623, %v2625
      %v2627 = vrot.slane %v273, 1
      %v2628 = vrot.slane %v274, 1
      %v2629 = vsel %vm2556, %v2627, %v2628
      %v2630 = vrot.slane %v275, 1
      %v2631 = vsel %vm2556, %v2628, %v2630
      %v2632 = vrot.slane %v276, 1
      %v2633 = vrot.slane %v277, 1
      %v2634 = vsel %vm2556, %v2632, %v2633
      %v2635 = vrot.slane %v278, 1
      %v2636 = vsel %vm2556, %v2633, %v2635
      %v2669 = vadd.f32 %v2476, %v2559
      %v2670 = vadd.f32 %v2477, %v2561
      %v2671 = vadd.f32 %v2478, %v2564
      %v2672 = vadd.f32 %v2479, %v2566
      %v2673 = vadd.f32 %v2480, %v2569
      %v2674 = vadd.f32 %v2481, %v2571
      %v2675 = vadd.f32 %v2482, %v2574
      %v2676 = vadd.f32 %v2483, %v2576
      %v2677 = vadd.f32 %v2484, %v2579
      %v2678 = vadd.f32 %v2485, %v2581
      %v2679 = vadd.f32 %v2486, %v2584
      %v2680 = vadd.f32 %v2487, %v2586
      %v2681 = vadd.f32 %v2488, %v2589
      %v2682 = vadd.f32 %v2489, %v2591
      %v2683 = vadd.f32 %v2490, %v2594
      %v2684 = vadd.f32 %v2491, %v2596
      %v2685 = vadd.f32 %v2492, %v2599
      %v2686 = vadd.f32 %v2493, %v2601
      %v2687 = vadd.f32 %v2494, %v2604
      %v2688 = vadd.f32 %v2495, %v2606
      %v2689 = vadd.f32 %v2496, %v2609
      %v2690 = vadd.f32 %v2497, %v2611
      %v2691 = vadd.f32 %v2498, %v2614
      %v2692 = vadd.f32 %v2499, %v2616
      %v2693 = vadd.f32 %v2500, %v2619
      %v2694 = vadd.f32 %v2501, %v2621
      %v2695 = vadd.f32 %v2502, %v2624
      %v2696 = vadd.f32 %v2503, %v2626
      %v2697 = vadd.f32 %v2504, %v2629
      %v2698 = vadd.f32 %v2505, %v2631
      %v2699 = vadd.f32 %v2506, %v2634
      %v2700 = vadd.f32 %v2507, %v2636
      %v2701 = vmax.f32 %v2669, 0.0
      %v2702 = vmax.f32 %v2670, 0.0
      %v2703 = vmax.f32 %v2671, 0.0
      %v2704 = vmax.f32 %v2672, 0.0
      %v2705 = vmax.f32 %v2673, 0.0
      %v2706 = vmax.f32 %v2674, 0.0
      %v2707 = vmax.f32 %v2675, 0.0
      %v2708 = vmax.f32 %v2676, 0.0
      %v2709 = vmax.f32 %v2677, 0.0
      %v2710 = vmax.f32 %v2678, 0.0
      %v2711 = vmax.f32 %v2679, 0.0
      %v2712 = vmax.f32 %v2680, 0.0
      %v2713 = vmax.f32 %v2681, 0.0
      %v2714 = vmax.f32 %v2682, 0.0
      %v2715 = vmax.f32 %v2683, 0.0
      %v2716 = vmax.f32 %v2684, 0.0
      %v2717 = vmax.f32 %v2685, 0.0
      %v2718 = vmax.f32 %v2686, 0.0
      %v2719 = vmax.f32 %v2687, 0.0
      %v2720 = vmax.f32 %v2688, 0.0
      %v2721 = vmax.f32 %v2689, 0.0
      %v2722 = vmax.f32 %v2690, 0.0
      %v2723 = vmax.f32 %v2691, 0.0
      %v2724 = vmax.f32 %v2692, 0.0
      %v2725 = vmax.f32 %v2693, 0.0
      %v2726 = vmax.f32 %v2694, 0.0
      %v2727 = vmax.f32 %v2695, 0.0
      %v2728 = vmax.f32 %v2696, 0.0
      %v2729 = vmax.f32 %v2697, 0.0
      %v2730 = vmax.f32 %v2698, 0.0
      %v2731 = vmax.f32 %v2699, 0.0
      %v2732 = vmax.f32 %v2700, 0.0
      %2733 = vst.msk [vmem:[%s224] sm:$0xff] %vm764, %v2701
      %2734 = vst.msk [vmem:[%s224 + $0x8] sm:$0xff] %vm764, %v2702
      %2735 = vst.msk [vmem:[%s224 + $0x10] sm:$0xff] %vm764, %v2703
      %2736 = vst.msk [vmem:[%s224 + $0x18] sm:$0xff] %vm764, %v2704
      %2737 = vst.msk [vmem:[%s224 + $0x20] sm:$0xff] %vm764, %v2705
      %2738 = vst.msk [vmem:[%s224 + $0x28] sm:$0xff] %vm764, %v2706
      %2739 = vst.msk [vmem:[%s224 + $0x30] sm:$0xff] %vm764, %v2707
      %2740 = vst.msk [vmem:[%s224 + $0x38] sm:$0xff] %vm764, %v2708
      %2741 = vst.msk [vmem:[%s224 + $0x40] sm:$0xff] %vm764, %v2709
      %2742 = vst.msk [vmem:[%s224 + $0x48] sm:$0xff] %vm764, %v2710
      %2743 = vst.msk [vmem:[%s224 + $0x50] sm:$0xff] %vm764, %v2711
      %2744 = vst.msk [vmem:[%s224 + $0x58] sm:$0xff] %vm764, %v2712
      %2745 = vst.msk [vmem:[%s224 + $0x60] sm:$0xff] %vm764, %v2713
      %2746 = vst.msk [vmem:[%s224 + $0x68] sm:$0xff] %vm764, %v2714
      %2747 = vst.msk [vmem:[%s224 + $0x70] sm:$0xff] %vm764, %v2715
      %2748 = vst.msk [vmem:[%s224 + $0x78] sm:$0xff] %vm764, %v2716
      %2749 = vst.msk [vmem:[%s224 + $0x80] sm:$0xff] %vm764, %v2717
      %2750 = vst.msk [vmem:[%s224 + $0x88] sm:$0xff] %vm764, %v2718
      %2751 = vst.msk [vmem:[%s224 + $0x90] sm:$0xff] %vm764, %v2719
      %2752 = vst.msk [vmem:[%s224 + $0x98] sm:$0xff] %vm764, %v2720
      %2753 = vst.msk [vmem:[%s224 + $0xa0] sm:$0xff] %vm764, %v2721
      %2754 = vst.msk [vmem:[%s224 + $0xa8] sm:$0xff] %vm764, %v2722
      %2755 = vst.msk [vmem:[%s224 + $0xb0] sm:$0xff] %vm764, %v2723
      %2756 = vst.msk [vmem:[%s224 + $0xb8] sm:$0xff] %vm764, %v2724
      %2757 = vst.msk [vmem:[%s224 + $0xc0] sm:$0xff] %vm764, %v2725
      %2758 = vst.msk [vmem:[%s224 + $0xc8] sm:$0xff] %vm764, %v2726
      %2759 = vst.msk [vmem:[%s224 + $0xd0] sm:$0xff] %vm764, %v2727
      %2760 = vst.msk [vmem:[%s224 + $0xd8] sm:$0xff] %vm764, %v2728
      %2761 = vst.msk [vmem:[%s224 + $0xe0] sm:$0xff] %vm764, %v2729
      %2762 = vst.msk [vmem:[%s224 + $0xe8] sm:$0xff] %vm764, %v2730
      %2763 = vst.msk [vmem:[%s224 + $0xf0] sm:$0xff] %vm764, %v2731
      %2764 = vst.msk [vmem:[%s224 + $0xf8] sm:$0xff] %vm764, %v2732
      %p2765 = scmp.lt.s32.totalorder %s16, 1
      %s2766 = scalar_select %p2765, %s16, 1
      %s2767 = smul.addr %s2766, 32
      %s2768 = smul.addr %s2767, 8
      %s2769 = scalar_lea.vmem %s5, %s2768
      // Predicated region
      $region41: #{tpu_custom_call.1} parent=39 // pred_check
        %p2770 = pneg %p144
      $region42: #{tpu_custom_call.1} parent=39 // pred_check_branch
        %2772 = sbr.rel (%p2770) target = $region44
      $region43: #{tpu_custom_call.1} parent=39 // pred_region
        _
      $region44: #{tpu_custom_call.1} parent=39 // pred_fallthru
        _
    $region40: #{tpu_custom_call.1} parent=5 // pred_fallthru
      _
    %p2773 = scmp.le.s32.totalorder 2, %s11
    // Predicated region
    $region45: #{tpu_custom_call.1} parent=5 // pred_check
      %p2774 = pneg %p2773
    $region46: #{tpu_custom_call.1} parent=5 // pred_check_branch
      %2776 = sbr.rel (%p2774) target = $region48
    $region47: #{tpu_custom_call.1} parent=5 // pred_region
      %s2777 = ssub.s32 %s11, 2
      // Predicated region
      $region49: #{tpu_custom_call.1} parent=47 // pred_check
        %p2778 = pneg %p150
      $region50: #{tpu_custom_call.1} parent=47 // pred_check_branch
        %2780 = sbr.rel (%p2778) target = $region52
      $region51: #{tpu_custom_call.1} parent=47 // pred_region
        %p2781 = scmp.lt.s32.totalorder %s17, 1
        %s2782 = scalar_select %p2781, %s17, 1
        %s2783 = smul.addr %s2782, 32
        %s2784 = smul.addr %s2783, 8
        %s2785 = scalar_lea.vmem %s5, %s2784
      $region52: #{tpu_custom_call.1} parent=47 // pred_fallthru
        _
    $region48: #{tpu_custom_call.1} parent=5 // pred_fallthru
      _
  $region6: #{tpu_custom_call.1} parent=0 // loop_footer
    %s15 = sadd.s32 1, %s11
  $region7: #{tpu_custom_call.1} parent=0 // loop_footer_branch
    %10 = sbr.rel target = $region3
  $region8: #{tpu_custom_call.1} parent=0 // loop_exit
    _

</llo_original>
